<compile_context>
chip_gen: v6e
topology: v6e:2x2x1
jax: 0.10.0
libtpu: 0.0.40
codegen_flags: <defaults>
</compile_context>

<pallas_src>
import functools

import jax
import jax.numpy as jnp
from jax.experimental import pallas as pl
from jax.experimental.pallas import tpu as pltpu

# ---------------- small synthetic BERT config ----------------
VOCAB = 64
HIDDEN = 32
NHEADS = 2
DHEAD = HIDDEN // NHEADS
NLAYERS = 2
INTER = 64
MAXPOS = 16
NTYPES = 2
NLABELS = 2
LN_EPS = 1e-12

MXU_DTYPE = jnp.bfloat16  # matmul operand dtype; accumulation stays f32

# Whole (tiny) arrays live in VMEM; far below VMEM budget, no grid tiling.
VMEM_SPEC = pl.BlockSpec(memory_space=pltpu.MemorySpace.VMEM)


# ---------------- in-kernel helpers (operate on values) ----------------
def _mm(a, w):
    """activation @ weight on the MXU: bf16 operands (weights pre-cast), f32 acc."""
    return jnp.dot(a.astype(MXU_DTYPE), w, preferred_element_type=jnp.float32)


def _gelu(x):
    # tanh-approximate GELU; HF BERT default is erf GELU (diff ~1e-3).
    # TODO(synk): switch to erf GELU if bit-matching PyTorch is required.
    c = 0.7978845608028654  # sqrt(2/pi)
    return 0.5 * x * (1.0 + jnp.tanh(c * (x + 0.044715 * x * x * x)))


def _layernorm(x, g, b):
    mean = jnp.mean(x, axis=-1, keepdims=True)
    xc = x - mean
    var = jnp.mean(xc * xc, axis=-1, keepdims=True)
    return xc * jax.lax.rsqrt(var + LN_EPS) * g + b


def _softmax_lastdim(s):
    s = s - jnp.max(s, axis=-1, keepdims=True)
    p = jnp.exp(s)
    return p * pl.reciprocal(jnp.sum(p, axis=-1, keepdims=True), approx=True)


# ---------------- fused forward kernel ----------------
def bert_fused_kernel(
        emb_ref, mask_ref, y_ref,
        emb_ln_g_ref, emb_ln_b_ref,
        wqkv_ref, bqkv_ref, wo_ref, bo_ref, ln1_g_ref, ln1_b_ref,
        wi_ref, bi_ref, wo2_ref, bo2_ref, ln2_g_ref, ln2_b_ref,
        wp_ref, bp_ref, wc_ref, bc_ref,
        loss_ref, logits_ref, probs_ref,
        *, batch, seq):
    scale = 1.0 / (DHEAD ** 0.5)

    # Embedding LayerNorm (residual-free path).
    x = _layernorm(emb_ref[...], emb_ln_g_ref[...], emb_ln_b_ref[...])  # (B*S, H)

    # Additive attention mask (B, 1, S), broadcast over query rows in-kernel.
    add_mask = ((1.0 - mask_ref[...]) * -10000.0)[:, None, :]

    for l in range(NLAYERS):
        # Fused QKV projection: one (B*S, H) @ (H, 3H) matmul (bf16 weights).
        qkv = _mm(x, wqkv_ref[l]) + bqkv_ref[l]                   # (B*S, 3H) f32
        qkv3 = qkv.reshape(batch, seq, 3 * HIDDEN)                # leading split only

        # Attention: batched over B inside the dot_general; only a static
        # NHEADS(=2) loop remains.
        ctx_heads = []
        for h in range(NHEADS):
            c0 = h * DHEAD
            q = qkv3[:, :, c0:c0 + DHEAD]                         # (B, S, Dh)
            k = qkv3[:, :, HIDDEN + c0:HIDDEN + c0 + DHEAD]
            v = qkv3[:, :, 2 * HIDDEN + c0:2 * HIDDEN + c0 + DHEAD]
            s = jnp.einsum('bqd,bkd->bqk',
                           q.astype(MXU_DTYPE), k.astype(MXU_DTYPE),
                           preferred_element_type=jnp.float32) * scale + add_mask
            p = _softmax_lastdim(s)                               # (B, S, S) f32
            ctx_heads.append(jnp.einsum('bqk,bkd->bqd',
                                        p.astype(MXU_DTYPE), v.astype(MXU_DTYPE),
                                        preferred_element_type=jnp.float32))
        ctx = jnp.concatenate(ctx_heads, axis=-1)                 # (B, S, H)
        ctx = ctx.reshape(batch * seq, HIDDEN)                    # leading merge only

        # Single output projection over all heads; result stays a value.
        attn_out = _mm(ctx, wo_ref[l]) + bo_ref[l]                # (B*S, H)
        # TODO(synk): dropout omitted (identity in eval mode).
        x = _layernorm(attn_out + x, ln1_g_ref[l], ln1_b_ref[l])

        inter = _gelu(_mm(x, wi_ref[l]) + bi_ref[l])              # (B*S, INTER)
        ffn_out = _mm(inter, wo2_ref[l]) + bo2_ref[l]
        x = _layernorm(ffn_out + x, ln2_g_ref[l], ln2_b_ref[l])

    # ---------------- fused classification head ----------------
    # [CLS] rows are static offsets b*seq: aligned static sublane slices.
    cls = jnp.concatenate([x[b * seq:b * seq + 1, :] for b in range(batch)],
                          axis=0)                                 # (B, H)

    pooled = jnp.tanh(_mm(cls, wp_ref[...]) + bp_ref[...])
    logits = _mm(pooled, wc_ref[...]) + bc_ref[...]               # (B, NLABELS)
    logits_ref[...] = logits

    zmax = jnp.max(logits, axis=-1, keepdims=True)
    e = jnp.exp(logits - zmax)
    denom = jnp.sum(e, axis=-1, keepdims=True)
    probs_ref[...] = e * pl.reciprocal(denom, approx=True)
    logp = (logits - zmax) - jnp.log(denom)
    nll = -jnp.sum(y_ref[...] * logp, axis=-1, keepdims=True)     # (B, 1)
    loss_ref[...] = jnp.mean(nll, keepdims=True)                  # (1, 1)


# ---------------- parameters ----------------
def init_params(key):
    keys = iter(jax.random.split(key, 64))

    def nrm(shape):
        return 0.02 * jax.random.normal(next(keys), shape, dtype=jnp.float32)

    def zeros(shape):
        return jnp.zeros(shape, jnp.float32)

    def ones(shape):
        return jnp.ones(shape, jnp.float32)

    return {
        "word_emb": nrm((VOCAB, HIDDEN)),
        "pos_emb": nrm((MAXPOS, HIDDEN)),
        "type_emb": nrm((NTYPES, HIDDEN)),
        "emb_ln_g": ones((1, HIDDEN)), "emb_ln_b": zeros((1, HIDDEN)),
        # per-layer weights stacked along a leading NLAYERS axis
        "wqkv": nrm((NLAYERS, HIDDEN, 3 * HIDDEN)),
        "bqkv": zeros((NLAYERS, 1, 3 * HIDDEN)),
        "wo": nrm((NLAYERS, HIDDEN, HIDDEN)), "bo": zeros((NLAYERS, 1, HIDDEN)),
        "ln1_g": ones((NLAYERS, 1, HIDDEN)), "ln1_b": zeros((NLAYERS, 1, HIDDEN)),
        "wi": nrm((NLAYERS, HIDDEN, INTER)), "bi": zeros((NLAYERS, 1, INTER)),
        "wo2": nrm((NLAYERS, INTER, HIDDEN)), "bo2": zeros((NLAYERS, 1, HIDDEN)),
        "ln2_g": ones((NLAYERS, 1, HIDDEN)), "ln2_b": zeros((NLAYERS, 1, HIDDEN)),
        "wp": nrm((HIDDEN, HIDDEN)), "bp": zeros((1, HIDDEN)),     # pooler
        "wc": nrm((HIDDEN, NLABELS)), "bc": zeros((1, NLABELS)),   # classifier
    }


# ---------------- forward ----------------
def bert_forward(params, input_ids, attention_mask, token_type_ids, labels):
    B, S = input_ids.shape

    # Embedding lookups (gather) stay in JAX glue.
    emb = (params["word_emb"][input_ids]
           + params["pos_emb"][jnp.arange(S)][None, :, :]
           + params["type_emb"][token_type_ids]).reshape(B * S, HIDDEN)

    mask_f = attention_mask.astype(jnp.float32)                 # (B, S)
    if labels is None:
        onehot = jnp.zeros((B, NLABELS), jnp.float32)
    else:
        onehot = jax.nn.one_hot(labels, NLABELS, dtype=jnp.float32)

    # Matmul weights enter the kernel pre-cast to bf16 (halves their DMA
    # bytes, removes repeated in-kernel casts); biases / LN params stay f32.
    bf = lambda w: w.astype(MXU_DTYPE)

    kernel = functools.partial(bert_fused_kernel, batch=B, seq=S)
    loss, logits, probs = pl.pallas_call(
        kernel,
        out_shape=(jax.ShapeDtypeStruct((1, 1), jnp.float32),
                   jax.ShapeDtypeStruct((B, NLABELS), jnp.float32),
                   jax.ShapeDtypeStruct((B, NLABELS), jnp.float32)),
        in_specs=[VMEM_SPEC] * 21,
        out_specs=(VMEM_SPEC, VMEM_SPEC, VMEM_SPEC),
    )(emb, mask_f, onehot,
      params["emb_ln_g"], params["emb_ln_b"],
      bf(params["wqkv"]), params["bqkv"], bf(params["wo"]), params["bo"],
      params["ln1_g"], params["ln1_b"],
      bf(params["wi"]), params["bi"], bf(params["wo2"]), params["bo2"],
      params["ln2_g"], params["ln2_b"],
      bf(params["wp"]), params["bp"], bf(params["wc"]), params["bc"])

    if labels is None:
        return logits
    return loss[0, 0], logits, probs


if __name__ == "__main__":
    key = jax.random.PRNGKey(0)
    pk, ik, lk = jax.random.split(key, 3)
    params = init_params(pk)

    B, S = 2, 8
    batch_seqs = jax.random.randint(ik, (B, S), 0, VOCAB, dtype=jnp.int32)
    batch_seq_masks = jnp.ones((B, S), jnp.int32).at[1, 6:].set(0)
    batch_seq_segments = jnp.zeros((B, S), jnp.int32)
    labels = jax.random.randint(lk, (B,), 0, NLABELS, dtype=jnp.int32)

    fwd = jax.jit(bert_forward)
    loss, logits, probs = fwd(params, batch_seqs, batch_seq_masks,
                              batch_seq_segments, labels)
    jax.block_until_ready((loss, logits, probs))

    assert logits.shape == (B, NLABELS)
    assert probs.shape == (B, NLABELS)
    assert loss.shape == ()
    print("KERNEL_OK")
</pallas_src>

<mosaic_0001>
module attributes {stable_mosaic.version = 11 : i64} {
  func.func @bert_fused_kernel(%arg0: memref<16x32xf32, #tpu.memory_space<vmem>>, %arg1: memref<2x8xf32, #tpu.memory_space<vmem>>, %arg2: memref<2x2xf32, #tpu.memory_space<vmem>>, %arg3: memref<1x32xf32, #tpu.memory_space<vmem>>, %arg4: memref<1x32xf32, #tpu.memory_space<vmem>>, %arg5: memref<2x32x96xbf16, #tpu.memory_space<vmem>>, %arg6: memref<2x1x96xf32, #tpu.memory_space<vmem>>, %arg7: memref<2x32x32xbf16, #tpu.memory_space<vmem>>, %arg8: memref<2x1x32xf32, #tpu.memory_space<vmem>>, %arg9: memref<2x1x32xf32, #tpu.memory_space<vmem>>, %arg10: memref<2x1x32xf32, #tpu.memory_space<vmem>>, %arg11: memref<2x32x64xbf16, #tpu.memory_space<vmem>>, %arg12: memref<2x1x64xf32, #tpu.memory_space<vmem>>, %arg13: memref<2x64x32xbf16, #tpu.memory_space<vmem>>, %arg14: memref<2x1x32xf32, #tpu.memory_space<vmem>>, %arg15: memref<2x1x32xf32, #tpu.memory_space<vmem>>, %arg16: memref<2x1x32xf32, #tpu.memory_space<vmem>>, %arg17: memref<32x32xbf16, #tpu.memory_space<vmem>>, %arg18: memref<1x32xf32, #tpu.memory_space<vmem>>, %arg19: memref<32x2xbf16, #tpu.memory_space<vmem>>, %arg20: memref<1x2xf32, #tpu.memory_space<vmem>>, %arg21: memref<1x1xf32, #tpu.memory_space<vmem>>, %arg22: memref<2x2xf32, #tpu.memory_space<vmem>>, %arg23: memref<2x2xf32, #tpu.memory_space<vmem>>) attributes {dimension_semantics = [], scalar_prefetch = 0 : i64, scratch_operands = 0 : i64, tpu.core_type = #tpu.core_type<tc>} {
    %c0 = arith.constant 0 : index
    %c0_0 = arith.constant 0 : index
    %0 = vector.load %arg0[%c0, %c0_0] : memref<16x32xf32, #tpu.memory_space<vmem>>, vector<16x32xf32>
    %c0_1 = arith.constant 0 : index
    %c0_2 = arith.constant 0 : index
    %1 = vector.load %arg3[%c0_1, %c0_2] : memref<1x32xf32, #tpu.memory_space<vmem>>, vector<1x32xf32>
    %c0_3 = arith.constant 0 : index
    %c0_4 = arith.constant 0 : index
    %2 = vector.load %arg4[%c0_3, %c0_4] : memref<1x32xf32, #tpu.memory_space<vmem>>, vector<1x32xf32>
    %cst = arith.constant dense<0.000000e+00> : vector<16xf32>
    %3 = vector.multi_reduction <add>, %0, %cst [1] : vector<16x32xf32> to vector<16xf32>
    %4 = vector.shape_cast %3 : vector<16xf32> to vector<16x1xf32>
    %cst_5 = arith.constant 3.200000e+01 : f32
    %5 = vector.broadcast %cst_5 : f32 to vector<16x1xf32>
    %6 = arith.divf %4, %5 : vector<16x1xf32>
    %7 = vector.broadcast %6 : vector<16x1xf32> to vector<16x32xf32>
    %8 = arith.subf %0, %7 : vector<16x32xf32>
    %9 = arith.mulf %8, %8 : vector<16x32xf32>
    %cst_6 = arith.constant dense<0.000000e+00> : vector<16xf32>
    %10 = vector.multi_reduction <add>, %9, %cst_6 [1] : vector<16x32xf32> to vector<16xf32>
    %11 = vector.shape_cast %10 : vector<16xf32> to vector<16x1xf32>
    %cst_7 = arith.constant 3.200000e+01 : f32
    %12 = vector.broadcast %cst_7 : f32 to vector<16x1xf32>
    %13 = arith.divf %11, %12 : vector<16x1xf32>
    %cst_8 = arith.constant 9.99999996E-13 : f32
    %14 = vector.broadcast %cst_8 : f32 to vector<16x1xf32>
    %15 = arith.addf %13, %14 : vector<16x1xf32>
    %16 = math.rsqrt %15 : vector<16x1xf32>
    %17 = vector.broadcast %16 : vector<16x1xf32> to vector<16x32xf32>
    %18 = arith.mulf %8, %17 : vector<16x32xf32>
    %19 = vector.broadcast %1 : vector<1x32xf32> to vector<16x32xf32>
    %20 = arith.mulf %18, %19 : vector<16x32xf32>
    %21 = vector.broadcast %2 : vector<1x32xf32> to vector<16x32xf32>
    %22 = arith.addf %20, %21 : vector<16x32xf32>
    %c0_9 = arith.constant 0 : index
    %c0_10 = arith.constant 0 : index
    %23 = vector.load %arg1[%c0_9, %c0_10] : memref<2x8xf32, #tpu.memory_space<vmem>>, vector<2x8xf32>
    %cst_11 = arith.constant 1.000000e+00 : f32
    %24 = vector.broadcast %cst_11 : f32 to vector<2x8xf32>
    %25 = arith.subf %24, %23 : vector<2x8xf32>
    %cst_12 = arith.constant -1.000000e+04 : f32
    %26 = vector.broadcast %cst_12 : f32 to vector<2x8xf32>
    %27 = arith.mulf %25, %26 : vector<2x8xf32>
    %28 = vector.shape_cast %27 : vector<2x8xf32> to vector<2x1x8xf32>
    %c0_13 = arith.constant 0 : index
    %c0_14 = arith.constant 0 : index
    %c0_15 = arith.constant 0 : index
    %29 = vector.load %arg5[%c0_13, %c0_14, %c0_15] : memref<2x32x96xbf16, #tpu.memory_space<vmem>>, vector<1x32x96xbf16>
    %30 = vector.shape_cast %29 : vector<1x32x96xbf16> to vector<32x96xbf16>
    %31 = arith.truncf %22 : vector<16x32xf32> to vector<16x32xbf16>
    %cst_16 = arith.constant dense<0.000000e+00> : vector<16x96xf32>
    %32 = tpu.matmul %31, %30, %cst_16 {dimension_numbers = #tpu.dot_dimension_numbers<[1], [0], [0], [1], [0, 0, 1, 1], [], []>} : vector<16x32xbf16>, vector<32x96xbf16>, vector<16x96xf32> -> vector<16x96xf32>
    %c0_17 = arith.constant 0 : index
    %c0_18 = arith.constant 0 : index
    %c0_19 = arith.constant 0 : index
    %33 = vector.load %arg6[%c0_17, %c0_18, %c0_19] : memref<2x1x96xf32, #tpu.memory_space<vmem>>, vector<1x1x96xf32>
    %34 = vector.shape_cast %33 : vector<1x1x96xf32> to vector<1x96xf32>
    %35 = vector.broadcast %34 : vector<1x96xf32> to vector<16x96xf32>
    %36 = arith.addf %32, %35 : vector<16x96xf32>
    %37 = vector.shape_cast %36 : vector<16x96xf32> to vector<2x8x96xf32>
    %38 = vector.extract_strided_slice %37 {offsets = [0, 0, 0], sizes = [2, 8, 16], strides = [1, 1, 1]} : vector<2x8x96xf32> to vector<2x8x16xf32>
    %39 = vector.extract_strided_slice %37 {offsets = [0, 0, 32], sizes = [2, 8, 16], strides = [1, 1, 1]} : vector<2x8x96xf32> to vector<2x8x16xf32>
    %40 = vector.extract_strided_slice %37 {offsets = [0, 0, 64], sizes = [2, 8, 16], strides = [1, 1, 1]} : vector<2x8x96xf32> to vector<2x8x16xf32>
    %41 = arith.truncf %38 : vector<2x8x16xf32> to vector<2x8x16xbf16>
    %42 = arith.truncf %39 : vector<2x8x16xf32> to vector<2x8x16xbf16>
    "tpu.trace_start"() <{level = 10 : i32, message = "bqd,bkd->bqk"}> : () -> ()
    %cst_20 = arith.constant dense<0.000000e+00> : vector<2x8x8xf32>
    %43 = tpu.matmul %41, %42, %cst_20 {dimension_numbers = #tpu.dot_dimension_numbers<[2], [2], [1], [1], [0, 0, 0, 1, 1, 1], [0], [0]>} : vector<2x8x16xbf16>, vector<2x8x16xbf16>, vector<2x8x8xf32> -> vector<2x8x8xf32>
    "tpu.trace_stop"() : () -> ()
    %cst_21 = arith.constant 2.500000e-01 : f32
    %44 = vector.broadcast %cst_21 : f32 to vector<2x8x8xf32>
    %45 = arith.mulf %43, %44 : vector<2x8x8xf32>
    %46 = vector.broadcast %28 : vector<2x1x8xf32> to vector<2x8x8xf32>
    %47 = arith.addf %45, %46 : vector<2x8x8xf32>
    %cst_22 = arith.constant dense<0xFF800000> : vector<2x8xf32>
    %48 = vector.multi_reduction <maximumf>, %47, %cst_22 [2] : vector<2x8x8xf32> to vector<2x8xf32>
    %49 = vector.shape_cast %48 : vector<2x8xf32> to vector<2x8x1xf32>
    %50 = vector.broadcast %49 : vector<2x8x1xf32> to vector<2x8x8xf32>
    %51 = arith.subf %47, %50 : vector<2x8x8xf32>
    %52 = math.exp %51 : vector<2x8x8xf32>
    %cst_23 = arith.constant dense<0.000000e+00> : vector<2x8xf32>
    %53 = vector.multi_reduction <add>, %52, %cst_23 [2] : vector<2x8x8xf32> to vector<2x8xf32>
    %54 = vector.shape_cast %53 : vector<2x8xf32> to vector<2x8x1xf32>
    %55 = tpu.reciprocal %54 {approx = true} : vector<2x8x1xf32> -> vector<2x8x1xf32>
    %56 = vector.broadcast %55 : vector<2x8x1xf32> to vector<2x8x8xf32>
    %57 = arith.mulf %52, %56 : vector<2x8x8xf32>
    %58 = arith.truncf %57 : vector<2x8x8xf32> to vector<2x8x8xbf16>
    %59 = arith.truncf %40 : vector<2x8x16xf32> to vector<2x8x16xbf16>
    "tpu.trace_start"() <{level = 10 : i32, message = "bqk,bkd->bqd"}> : () -> ()
    %cst_24 = arith.constant dense<0.000000e+00> : vector<2x8x16xf32>
    %60 = tpu.matmul %58, %59, %cst_24 {dimension_numbers = #tpu.dot_dimension_numbers<[2], [1], [1], [2], [0, 0, 0, 1, 1, 2], [0], [0]>} : vector<2x8x8xbf16>, vector<2x8x16xbf16>, vector<2x8x16xf32> -> vector<2x8x16xf32>
    "tpu.trace_stop"() : () -> ()
    %61 = vector.extract_strided_slice %37 {offsets = [0, 0, 16], sizes = [2, 8, 16], strides = [1, 1, 1]} : vector<2x8x96xf32> to vector<2x8x16xf32>
    %62 = vector.extract_strided_slice %37 {offsets = [0, 0, 48], sizes = [2, 8, 16], strides = [1, 1, 1]} : vector<2x8x96xf32> to vector<2x8x16xf32>
    %63 = vector.extract_strided_slice %37 {offsets = [0, 0, 80], sizes = [2, 8, 16], strides = [1, 1, 1]} : vector<2x8x96xf32> to vector<2x8x16xf32>
    %64 = arith.truncf %61 : vector<2x8x16xf32> to vector<2x8x16xbf16>
    %65 = arith.truncf %62 : vector<2x8x16xf32> to vector<2x8x16xbf16>
    "tpu.trace_start"() <{level = 10 : i32, message = "bqd,bkd->bqk"}> : () -> ()
    %cst_25 = arith.constant dense<0.000000e+00> : vector<2x8x8xf32>
    %66 = tpu.matmul %64, %65, %cst_25 {dimension_numbers = #tpu.dot_dimension_numbers<[2], [2], [1], [1], [0, 0, 0, 1, 1, 1], [0], [0]>} : vector<2x8x16xbf16>, vector<2x8x16xbf16>, vector<2x8x8xf32> -> vector<2x8x8xf32>
    "tpu.trace_stop"() : () -> ()
    %cst_26 = arith.constant 2.500000e-01 : f32
    %67 = vector.broadcast %cst_26 : f32 to vector<2x8x8xf32>
    %68 = arith.mulf %66, %67 : vector<2x8x8xf32>
    %69 = vector.broadcast %28 : vector<2x1x8xf32> to vector<2x8x8xf32>
    %70 = arith.addf %68, %69 : vector<2x8x8xf32>
    %cst_27 = arith.constant dense<0xFF800000> : vector<2x8xf32>
    %71 = vector.multi_reduction <maximumf>, %70, %cst_27 [2] : vector<2x8x8xf32> to vector<2x8xf32>
    %72 = vector.shape_cast %71 : vector<2x8xf32> to vector<2x8x1xf32>
    %73 = vector.broadcast %72 : vector<2x8x1xf32> to vector<2x8x8xf32>
    %74 = arith.subf %70, %73 : vector<2x8x8xf32>
    %75 = math.exp %74 : vector<2x8x8xf32>
    %cst_28 = arith.constant dense<0.000000e+00> : vector<2x8xf32>
    %76 = vector.multi_reduction <add>, %75, %cst_28 [2] : vector<2x8x8xf32> to vector<2x8xf32>
    %77 = vector.shape_cast %76 : vector<2x8xf32> to vector<2x8x1xf32>
    %78 = tpu.reciprocal %77 {approx = true} : vector<2x8x1xf32> -> vector<2x8x1xf32>
    %79 = vector.broadcast %78 : vector<2x8x1xf32> to vector<2x8x8xf32>
    %80 = arith.mulf %75, %79 : vector<2x8x8xf32>
    %81 = arith.truncf %80 : vector<2x8x8xf32> to vector<2x8x8xbf16>
    %82 = arith.truncf %63 : vector<2x8x16xf32> to vector<2x8x16xbf16>
    "tpu.trace_start"() <{level = 10 : i32, message = "bqk,bkd->bqd"}> : () -> ()
    %cst_29 = arith.constant dense<0.000000e+00> : vector<2x8x16xf32>
    %83 = tpu.matmul %81, %82, %cst_29 {dimension_numbers = #tpu.dot_dimension_numbers<[2], [1], [1], [2], [0, 0, 0, 1, 1, 2], [0], [0]>} : vector<2x8x8xbf16>, vector<2x8x16xbf16>, vector<2x8x16xf32> -> vector<2x8x16xf32>
    "tpu.trace_stop"() : () -> ()
    %84 = tpu.concatenate %60, %83 in 2 : vector<2x8x16xf32>, vector<2x8x16xf32> -> vector<2x8x32xf32>
    %85 = vector.shape_cast %84 : vector<2x8x32xf32> to vector<16x32xf32>
    %c0_30 = arith.constant 0 : index
    %c0_31 = arith.constant 0 : index
    %c0_32 = arith.constant 0 : index
    %86 = vector.load %arg7[%c0_30, %c0_31, %c0_32] : memref<2x32x32xbf16, #tpu.memory_space<vmem>>, vector<1x32x32xbf16>
    %87 = vector.shape_cast %86 : vector<1x32x32xbf16> to vector<32x32xbf16>
    %88 = arith.truncf %85 : vector<16x32xf32> to vector<16x32xbf16>
    %cst_33 = arith.constant dense<0.000000e+00> : vector<16x32xf32>
    %89 = tpu.matmul %88, %87, %cst_33 {dimension_numbers = #tpu.dot_dimension_numbers<[1], [0], [0], [1], [0, 0, 1, 1], [], []>} : vector<16x32xbf16>, vector<32x32xbf16>, vector<16x32xf32> -> vector<16x32xf32>
    %c0_34 = arith.constant 0 : index
    %c0_35 = arith.constant 0 : index
    %c0_36 = arith.constant 0 : index
    %90 = vector.load %arg8[%c0_34, %c0_35, %c0_36] : memref<2x1x32xf32, #tpu.memory_space<vmem>>, vector<1x1x32xf32>
    %91 = vector.shape_cast %90 : vector<1x1x32xf32> to vector<1x32xf32>
    %92 = vector.broadcast %91 : vector<1x32xf32> to vector<16x32xf32>
    %93 = arith.addf %89, %92 : vector<16x32xf32>
    %94 = arith.addf %93, %22 : vector<16x32xf32>
    %c0_37 = arith.constant 0 : index
    %c0_38 = arith.constant 0 : index
    %c0_39 = arith.constant 0 : index
    %95 = vector.load %arg9[%c0_37, %c0_38, %c0_39] : memref<2x1x32xf32, #tpu.memory_space<vmem>>, vector<1x1x32xf32>
    %96 = vector.shape_cast %95 : vector<1x1x32xf32> to vector<1x32xf32>
    %c0_40 = arith.constant 0 : index
    %c0_41 = arith.constant 0 : index
    %c0_42 = arith.constant 0 : index
    %97 = vector.load %arg10[%c0_40, %c0_41, %c0_42] : memref<2x1x32xf32, #tpu.memory_space<vmem>>, vector<1x1x32xf32>
    %98 = vector.shape_cast %97 : vector<1x1x32xf32> to vector<1x32xf32>
    %cst_43 = arith.constant dense<0.000000e+00> : vector<16xf32>
    %99 = vector.multi_reduction <add>, %94, %cst_43 [1] : vector<16x32xf32> to vector<16xf32>
    %100 = vector.shape_cast %99 : vector<16xf32> to vector<16x1xf32>
    %cst_44 = arith.constant 3.200000e+01 : f32
    %101 = vector.broadcast %cst_44 : f32 to vector<16x1xf32>
    %102 = arith.divf %100, %101 : vector<16x1xf32>
    %103 = vector.broadcast %102 : vector<16x1xf32> to vector<16x32xf32>
    %104 = arith.subf %94, %103 : vector<16x32xf32>
    %105 = arith.mulf %104, %104 : vector<16x32xf32>
    %cst_45 = arith.constant dense<0.000000e+00> : vector<16xf32>
    %106 = vector.multi_reduction <add>, %105, %cst_45 [1] : vector<16x32xf32> to vector<16xf32>
    %107 = vector.shape_cast %106 : vector<16xf32> to vector<16x1xf32>
    %cst_46 = arith.constant 3.200000e+01 : f32
    %108 = vector.broadcast %cst_46 : f32 to vector<16x1xf32>
    %109 = arith.divf %107, %108 : vector<16x1xf32>
    %cst_47 = arith.constant 9.99999996E-13 : f32
    %110 = vector.broadcast %cst_47 : f32 to vector<16x1xf32>
    %111 = arith.addf %109, %110 : vector<16x1xf32>
    %112 = math.rsqrt %111 : vector<16x1xf32>
    %113 = vector.broadcast %112 : vector<16x1xf32> to vector<16x32xf32>
    %114 = arith.mulf %104, %113 : vector<16x32xf32>
    %115 = vector.broadcast %96 : vector<1x32xf32> to vector<16x32xf32>
    %116 = arith.mulf %114, %115 : vector<16x32xf32>
    %117 = vector.broadcast %98 : vector<1x32xf32> to vector<16x32xf32>
    %118 = arith.addf %116, %117 : vector<16x32xf32>
    %c0_48 = arith.constant 0 : index
    %c0_49 = arith.constant 0 : index
    %c0_50 = arith.constant 0 : index
    %119 = vector.load %arg11[%c0_48, %c0_49, %c0_50] : memref<2x32x64xbf16, #tpu.memory_space<vmem>>, vector<1x32x64xbf16>
    %120 = vector.shape_cast %119 : vector<1x32x64xbf16> to vector<32x64xbf16>
    %121 = arith.truncf %118 : vector<16x32xf32> to vector<16x32xbf16>
    %cst_51 = arith.constant dense<0.000000e+00> : vector<16x64xf32>
    %122 = tpu.matmul %121, %120, %cst_51 {dimension_numbers = #tpu.dot_dimension_numbers<[1], [0], [0], [1], [0, 0, 1, 1], [], []>} : vector<16x32xbf16>, vector<32x64xbf16>, vector<16x64xf32> -> vector<16x64xf32>
    %c0_52 = arith.constant 0 : index
    %c0_53 = arith.constant 0 : index
    %c0_54 = arith.constant 0 : index
    %123 = vector.load %arg12[%c0_52, %c0_53, %c0_54] : memref<2x1x64xf32, #tpu.memory_space<vmem>>, vector<1x1x64xf32>
    %124 = vector.shape_cast %123 : vector<1x1x64xf32> to vector<1x64xf32>
    %125 = vector.broadcast %124 : vector<1x64xf32> to vector<16x64xf32>
    %126 = arith.addf %122, %125 : vector<16x64xf32>
    %cst_55 = arith.constant 5.000000e-01 : f32
    %127 = vector.broadcast %cst_55 : f32 to vector<16x64xf32>
    %128 = arith.mulf %127, %126 : vector<16x64xf32>
    %cst_56 = arith.constant 4.471500e-02 : f32
    %129 = vector.broadcast %cst_56 : f32 to vector<16x64xf32>
    %130 = arith.mulf %129, %126 : vector<16x64xf32>
    %131 = arith.mulf %130, %126 : vector<16x64xf32>
    %132 = arith.mulf %131, %126 : vector<16x64xf32>
    %133 = arith.addf %126, %132 : vector<16x64xf32>
    %cst_57 = arith.constant 0.797884583 : f32
    %134 = vector.broadcast %cst_57 : f32 to vector<16x64xf32>
    %135 = arith.mulf %134, %133 : vector<16x64xf32>
    %136 = math.tanh %135 : vector<16x64xf32>
    %cst_58 = arith.constant 1.000000e+00 : f32
    %137 = vector.broadcast %cst_58 : f32 to vector<16x64xf32>
    %138 = arith.addf %137, %136 : vector<16x64xf32>
    %139 = arith.mulf %128, %138 : vector<16x64xf32>
    %c0_59 = arith.constant 0 : index
    %c0_60 = arith.constant 0 : index
    %c0_61 = arith.constant 0 : index
    %140 = vector.load %arg13[%c0_59, %c0_60, %c0_61] : memref<2x64x32xbf16, #tpu.memory_space<vmem>>, vector<1x64x32xbf16>
    %141 = vector.shape_cast %140 : vector<1x64x32xbf16> to vector<64x32xbf16>
    %142 = arith.truncf %139 : vector<16x64xf32> to vector<16x64xbf16>
    %cst_62 = arith.constant dense<0.000000e+00> : vector<16x32xf32>
    %143 = tpu.matmul %142, %141, %cst_62 {dimension_numbers = #tpu.dot_dimension_numbers<[1], [0], [0], [1], [0, 0, 1, 1], [], []>} : vector<16x64xbf16>, vector<64x32xbf16>, vector<16x32xf32> -> vector<16x32xf32>
    %c0_63 = arith.constant 0 : index
    %c0_64 = arith.constant 0 : index
    %c0_65 = arith.constant 0 : index
    %144 = vector.load %arg14[%c0_63, %c0_64, %c0_65] : memref<2x1x32xf32, #tpu.memory_space<vmem>>, vector<1x1x32xf32>
    %145 = vector.shape_cast %144 : vector<1x1x32xf32> to vector<1x32xf32>
    %146 = vector.broadcast %145 : vector<1x32xf32> to vector<16x32xf32>
    %147 = arith.addf %143, %146 : vector<16x32xf32>
    %148 = arith.addf %147, %118 : vector<16x32xf32>
    %c0_66 = arith.constant 0 : index
    %c0_67 = arith.constant 0 : index
    %c0_68 = arith.constant 0 : index
    %149 = vector.load %arg15[%c0_66, %c0_67, %c0_68] : memref<2x1x32xf32, #tpu.memory_space<vmem>>, vector<1x1x32xf32>
    %150 = vector.shape_cast %149 : vector<1x1x32xf32> to vector<1x32xf32>
    %c0_69 = arith.constant 0 : index
    %c0_70 = arith.constant 0 : index
    %c0_71 = arith.constant 0 : index
    %151 = vector.load %arg16[%c0_69, %c0_70, %c0_71] : memref<2x1x32xf32, #tpu.memory_space<vmem>>, vector<1x1x32xf32>
    %152 = vector.shape_cast %151 : vector<1x1x32xf32> to vector<1x32xf32>
    %cst_72 = arith.constant dense<0.000000e+00> : vector<16xf32>
    %153 = vector.multi_reduction <add>, %148, %cst_72 [1] : vector<16x32xf32> to vector<16xf32>
    %154 = vector.shape_cast %153 : vector<16xf32> to vector<16x1xf32>
    %cst_73 = arith.constant 3.200000e+01 : f32
    %155 = vector.broadcast %cst_73 : f32 to vector<16x1xf32>
    %156 = arith.divf %154, %155 : vector<16x1xf32>
    %157 = vector.broadcast %156 : vector<16x1xf32> to vector<16x32xf32>
    %158 = arith.subf %148, %157 : vector<16x32xf32>
    %159 = arith.mulf %158, %158 : vector<16x32xf32>
    %cst_74 = arith.constant dense<0.000000e+00> : vector<16xf32>
    %160 = vector.multi_reduction <add>, %159, %cst_74 [1] : vector<16x32xf32> to vector<16xf32>
    %161 = vector.shape_cast %160 : vector<16xf32> to vector<16x1xf32>
    %cst_75 = arith.constant 3.200000e+01 : f32
    %162 = vector.broadcast %cst_75 : f32 to vector<16x1xf32>
    %163 = arith.divf %161, %162 : vector<16x1xf32>
    %cst_76 = arith.constant 9.99999996E-13 : f32
    %164 = vector.broadcast %cst_76 : f32 to vector<16x1xf32>
    %165 = arith.addf %163, %164 : vector<16x1xf32>
    %166 = math.rsqrt %165 : vector<16x1xf32>
    %167 = vector.broadcast %166 : vector<16x1xf32> to vector<16x32xf32>
    %168 = arith.mulf %158, %167 : vector<16x32xf32>
    %169 = vector.broadcast %150 : vector<1x32xf32> to vector<16x32xf32>
    %170 = arith.mulf %168, %169 : vector<16x32xf32>
    %171 = vector.broadcast %152 : vector<1x32xf32> to vector<16x32xf32>
    %172 = arith.addf %170, %171 : vector<16x32xf32>
    %c1 = arith.constant 1 : index
    %c0_77 = arith.constant 0 : index
    %c0_78 = arith.constant 0 : index
    %173 = vector.load %arg5[%c1, %c0_77, %c0_78] : memref<2x32x96xbf16, #tpu.memory_space<vmem>>, vector<1x32x96xbf16>
    %174 = vector.shape_cast %173 : vector<1x32x96xbf16> to vector<32x96xbf16>
    %175 = arith.truncf %172 : vector<16x32xf32> to vector<16x32xbf16>
    %cst_79 = arith.constant dense<0.000000e+00> : vector<16x96xf32>
    %176 = tpu.matmul %175, %174, %cst_79 {dimension_numbers = #tpu.dot_dimension_numbers<[1], [0], [0], [1], [0, 0, 1, 1], [], []>} : vector<16x32xbf16>, vector<32x96xbf16>, vector<16x96xf32> -> vector<16x96xf32>
    %c1_80 = arith.constant 1 : index
    %c0_81 = arith.constant 0 : index
    %c0_82 = arith.constant 0 : index
    %177 = vector.load %arg6[%c1_80, %c0_81, %c0_82] : memref<2x1x96xf32, #tpu.memory_space<vmem>>, vector<1x1x96xf32>
    %178 = vector.shape_cast %177 : vector<1x1x96xf32> to vector<1x96xf32>
    %179 = vector.broadcast %178 : vector<1x96xf32> to vector<16x96xf32>
    %180 = arith.addf %176, %179 : vector<16x96xf32>
    %181 = vector.shape_cast %180 : vector<16x96xf32> to vector<2x8x96xf32>
    %182 = vector.extract_strided_slice %181 {offsets = [0, 0, 0], sizes = [2, 8, 16], strides = [1, 1, 1]} : vector<2x8x96xf32> to vector<2x8x16xf32>
    %183 = vector.extract_strided_slice %181 {offsets = [0, 0, 32], sizes = [2, 8, 16], strides = [1, 1, 1]} : vector<2x8x96xf32> to vector<2x8x16xf32>
    %184 = vector.extract_strided_slice %181 {offsets = [0, 0, 64], sizes = [2, 8, 16], strides = [1, 1, 1]} : vector<2x8x96xf32> to vector<2x8x16xf32>
    %185 = arith.truncf %182 : vector<2x8x16xf32> to vector<2x8x16xbf16>
    %186 = arith.truncf %183 : vector<2x8x16xf32> to vector<2x8x16xbf16>
    "tpu.trace_start"() <{level = 10 : i32, message = "bqd,bkd->bqk"}> : () -> ()
    %cst_83 = arith.constant dense<0.000000e+00> : vector<2x8x8xf32>
    %187 = tpu.matmul %185, %186, %cst_83 {dimension_numbers = #tpu.dot_dimension_numbers<[2], [2], [1], [1], [0, 0, 0, 1, 1, 1], [0], [0]>} : vector<2x8x16xbf16>, vector<2x8x16xbf16>, vector<2x8x8xf32> -> vector<2x8x8xf32>
    "tpu.trace_stop"() : () -> ()
    %cst_84 = arith.constant 2.500000e-01 : f32
    %188 = vector.broadcast %cst_84 : f32 to vector<2x8x8xf32>
    %189 = arith.mulf %187, %188 : vector<2x8x8xf32>
    %190 = vector.broadcast %28 : vector<2x1x8xf32> to vector<2x8x8xf32>
    %191 = arith.addf %189, %190 : vector<2x8x8xf32>
    %cst_85 = arith.constant dense<0xFF800000> : vector<2x8xf32>
    %192 = vector.multi_reduction <maximumf>, %191, %cst_85 [2] : vector<2x8x8xf32> to vector<2x8xf32>
    %193 = vector.shape_cast %192 : vector<2x8xf32> to vector<2x8x1xf32>
    %194 = vector.broadcast %193 : vector<2x8x1xf32> to vector<2x8x8xf32>
    %195 = arith.subf %191, %194 : vector<2x8x8xf32>
    %196 = math.exp %195 : vector<2x8x8xf32>
    %cst_86 = arith.constant dense<0.000000e+00> : vector<2x8xf32>
    %197 = vector.multi_reduction <add>, %196, %cst_86 [2] : vector<2x8x8xf32> to vector<2x8xf32>
    %198 = vector.shape_cast %197 : vector<2x8xf32> to vector<2x8x1xf32>
    %199 = tpu.reciprocal %198 {approx = true} : vector<2x8x1xf32> -> vector<2x8x1xf32>
    %200 = vector.broadcast %199 : vector<2x8x1xf32> to vector<2x8x8xf32>
    %201 = arith.mulf %196, %200 : vector<2x8x8xf32>
    %202 = arith.truncf %201 : vector<2x8x8xf32> to vector<2x8x8xbf16>
    %203 = arith.truncf %184 : vector<2x8x16xf32> to vector<2x8x16xbf16>
    "tpu.trace_start"() <{level = 10 : i32, message = "bqk,bkd->bqd"}> : () -> ()
    %cst_87 = arith.constant dense<0.000000e+00> : vector<2x8x16xf32>
    %204 = tpu.matmul %202, %203, %cst_87 {dimension_numbers = #tpu.dot_dimension_numbers<[2], [1], [1], [2], [0, 0, 0, 1, 1, 2], [0], [0]>} : vector<2x8x8xbf16>, vector<2x8x16xbf16>, vector<2x8x16xf32> -> vector<2x8x16xf32>
    "tpu.trace_stop"() : () -> ()
    %205 = vector.extract_strided_slice %181 {offsets = [0, 0, 16], sizes = [2, 8, 16], strides = [1, 1, 1]} : vector<2x8x96xf32> to vector<2x8x16xf32>
    %206 = vector.extract_strided_slice %181 {offsets = [0, 0, 48], sizes = [2, 8, 16], strides = [1, 1, 1]} : vector<2x8x96xf32> to vector<2x8x16xf32>
    %207 = vector.extract_strided_slice %181 {offsets = [0, 0, 80], sizes = [2, 8, 16], strides = [1, 1, 1]} : vector<2x8x96xf32> to vector<2x8x16xf32>
    %208 = arith.truncf %205 : vector<2x8x16xf32> to vector<2x8x16xbf16>
    %209 = arith.truncf %206 : vector<2x8x16xf32> to vector<2x8x16xbf16>
    "tpu.trace_start"() <{level = 10 : i32, message = "bqd,bkd->bqk"}> : () -> ()
    %cst_88 = arith.constant dense<0.000000e+00> : vector<2x8x8xf32>
    %210 = tpu.matmul %208, %209, %cst_88 {dimension_numbers = #tpu.dot_dimension_numbers<[2], [2], [1], [1], [0, 0, 0, 1, 1, 1], [0], [0]>} : vector<2x8x16xbf16>, vector<2x8x16xbf16>, vector<2x8x8xf32> -> vector<2x8x8xf32>
    "tpu.trace_stop"() : () -> ()
    %cst_89 = arith.constant 2.500000e-01 : f32
    %211 = vector.broadcast %cst_89 : f32 to vector<2x8x8xf32>
    %212 = arith.mulf %210, %211 : vector<2x8x8xf32>
    %213 = vector.broadcast %28 : vector<2x1x8xf32> to vector<2x8x8xf32>
    %214 = arith.addf %212, %213 : vector<2x8x8xf32>
    %cst_90 = arith.constant dense<0xFF800000> : vector<2x8xf32>
    %215 = vector.multi_reduction <maximumf>, %214, %cst_90 [2] : vector<2x8x8xf32> to vector<2x8xf32>
    %216 = vector.shape_cast %215 : vector<2x8xf32> to vector<2x8x1xf32>
    %217 = vector.broadcast %216 : vector<2x8x1xf32> to vector<2x8x8xf32>
    %218 = arith.subf %214, %217 : vector<2x8x8xf32>
    %219 = math.exp %218 : vector<2x8x8xf32>
    %cst_91 = arith.constant dense<0.000000e+00> : vector<2x8xf32>
    %220 = vector.multi_reduction <add>, %219, %cst_91 [2] : vector<2x8x8xf32> to vector<2x8xf32>
    %221 = vector.shape_cast %220 : vector<2x8xf32> to vector<2x8x1xf32>
    %222 = tpu.reciprocal %221 {approx = true} : vector<2x8x1xf32> -> vector<2x8x1xf32>
    %223 = vector.broadcast %222 : vector<2x8x1xf32> to vector<2x8x8xf32>
    %224 = arith.mulf %219, %223 : vector<2x8x8xf32>
    %225 = arith.truncf %224 : vector<2x8x8xf32> to vector<2x8x8xbf16>
    %226 = arith.truncf %207 : vector<2x8x16xf32> to vector<2x8x16xbf16>
    "tpu.trace_start"() <{level = 10 : i32, message = "bqk,bkd->bqd"}> : () -> ()
    %cst_92 = arith.constant dense<0.000000e+00> : vector<2x8x16xf32>
    %227 = tpu.matmul %225, %226, %cst_92 {dimension_numbers = #tpu.dot_dimension_numbers<[2], [1], [1], [2], [0, 0, 0, 1, 1, 2], [0], [0]>} : vector<2x8x8xbf16>, vector<2x8x16xbf16>, vector<2x8x16xf32> -> vector<2x8x16xf32>
    "tpu.trace_stop"() : () -> ()
    %228 = tpu.concatenate %204, %227 in 2 : vector<2x8x16xf32>, vector<2x8x16xf32> -> vector<2x8x32xf32>
    %229 = vector.shape_cast %228 : vector<2x8x32xf32> to vector<16x32xf32>
    %c1_93 = arith.constant 1 : index
    %c0_94 = arith.constant 0 : index
    %c0_95 = arith.constant 0 : index
    %230 = vector.load %arg7[%c1_93, %c0_94, %c0_95] : memref<2x32x32xbf16, #tpu.memory_space<vmem>>, vector<1x32x32xbf16>
    %231 = vector.shape_cast %230 : vector<1x32x32xbf16> to vector<32x32xbf16>
    %232 = arith.truncf %229 : vector<16x32xf32> to vector<16x32xbf16>
    %cst_96 = arith.constant dense<0.000000e+00> : vector<16x32xf32>
    %233 = tpu.matmul %232, %231, %cst_96 {dimension_numbers = #tpu.dot_dimension_numbers<[1], [0], [0], [1], [0, 0, 1, 1], [], []>} : vector<16x32xbf16>, vector<32x32xbf16>, vector<16x32xf32> -> vector<16x32xf32>
    %c1_97 = arith.constant 1 : index
    %c0_98 = arith.constant 0 : index
    %c0_99 = arith.constant 0 : index
    %234 = vector.load %arg8[%c1_97, %c0_98, %c0_99] : memref<2x1x32xf32, #tpu.memory_space<vmem>>, vector<1x1x32xf32>
    %235 = vector.shape_cast %234 : vector<1x1x32xf32> to vector<1x32xf32>
    %236 = vector.broadcast %235 : vector<1x32xf32> to vector<16x32xf32>
    %237 = arith.addf %233, %236 : vector<16x32xf32>
    %238 = arith.addf %237, %172 : vector<16x32xf32>
    %c1_100 = arith.constant 1 : index
    %c0_101 = arith.constant 0 : index
    %c0_102 = arith.constant 0 : index
    %239 = vector.load %arg9[%c1_100, %c0_101, %c0_102] : memref<2x1x32xf32, #tpu.memory_space<vmem>>, vector<1x1x32xf32>
    %240 = vector.shape_cast %239 : vector<1x1x32xf32> to vector<1x32xf32>
    %c1_103 = arith.constant 1 : index
    %c0_104 = arith.constant 0 : index
    %c0_105 = arith.constant 0 : index
    %241 = vector.load %arg10[%c1_103, %c0_104, %c0_105] : memref<2x1x32xf32, #tpu.memory_space<vmem>>, vector<1x1x32xf32>
    %242 = vector.shape_cast %241 : vector<1x1x32xf32> to vector<1x32xf32>
    %cst_106 = arith.constant dense<0.000000e+00> : vector<16xf32>
    %243 = vector.multi_reduction <add>, %238, %cst_106 [1] : vector<16x32xf32> to vector<16xf32>
    %244 = vector.shape_cast %243 : vector<16xf32> to vector<16x1xf32>
    %cst_107 = arith.constant 3.200000e+01 : f32
    %245 = vector.broadcast %cst_107 : f32 to vector<16x1xf32>
    %246 = arith.divf %244, %245 : vector<16x1xf32>
    %247 = vector.broadcast %246 : vector<16x1xf32> to vector<16x32xf32>
    %248 = arith.subf %238, %247 : vector<16x32xf32>
    %249 = arith.mulf %248, %248 : vector<16x32xf32>
    %cst_108 = arith.constant dense<0.000000e+00> : vector<16xf32>
    %250 = vector.multi_reduction <add>, %249, %cst_108 [1] : vector<16x32xf32> to vector<16xf32>
    %251 = vector.shape_cast %250 : vector<16xf32> to vector<16x1xf32>
    %cst_109 = arith.constant 3.200000e+01 : f32
    %252 = vector.broadcast %cst_109 : f32 to vector<16x1xf32>
    %253 = arith.divf %251, %252 : vector<16x1xf32>
    %cst_110 = arith.constant 9.99999996E-13 : f32
    %254 = vector.broadcast %cst_110 : f32 to vector<16x1xf32>
    %255 = arith.addf %253, %254 : vector<16x1xf32>
    %256 = math.rsqrt %255 : vector<16x1xf32>
    %257 = vector.broadcast %256 : vector<16x1xf32> to vector<16x32xf32>
    %258 = arith.mulf %248, %257 : vector<16x32xf32>
    %259 = vector.broadcast %240 : vector<1x32xf32> to vector<16x32xf32>
    %260 = arith.mulf %258, %259 : vector<16x32xf32>
    %261 = vector.broadcast %242 : vector<1x32xf32> to vector<16x32xf32>
    %262 = arith.addf %260, %261 : vector<16x32xf32>
    %c1_111 = arith.constant 1 : index
    %c0_112 = arith.constant 0 : index
    %c0_113 = arith.constant 0 : index
    %263 = vector.load %arg11[%c1_111, %c0_112, %c0_113] : memref<2x32x64xbf16, #tpu.memory_space<vmem>>, vector<1x32x64xbf16>
    %264 = vector.shape_cast %263 : vector<1x32x64xbf16> to vector<32x64xbf16>
    %265 = arith.truncf %262 : vector<16x32xf32> to vector<16x32xbf16>
    %cst_114 = arith.constant dense<0.000000e+00> : vector<16x64xf32>
    %266 = tpu.matmul %265, %264, %cst_114 {dimension_numbers = #tpu.dot_dimension_numbers<[1], [0], [0], [1], [0, 0, 1, 1], [], []>} : vector<16x32xbf16>, vector<32x64xbf16>, vector<16x64xf32> -> vector<16x64xf32>
    %c1_115 = arith.constant 1 : index
    %c0_116 = arith.constant 0 : index
    %c0_117 = arith.constant 0 : index
    %267 = vector.load %arg12[%c1_115, %c0_116, %c0_117] : memref<2x1x64xf32, #tpu.memory_space<vmem>>, vector<1x1x64xf32>
    %268 = vector.shape_cast %267 : vector<1x1x64xf32> to vector<1x64xf32>
    %269 = vector.broadcast %268 : vector<1x64xf32> to vector<16x64xf32>
    %270 = arith.addf %266, %269 : vector<16x64xf32>
    %cst_118 = arith.constant 5.000000e-01 : f32
    %271 = vector.broadcast %cst_118 : f32 to vector<16x64xf32>
    %272 = arith.mulf %271, %270 : vector<16x64xf32>
    %cst_119 = arith.constant 4.471500e-02 : f32
    %273 = vector.broadcast %cst_119 : f32 to vector<16x64xf32>
    %274 = arith.mulf %273, %270 : vector<16x64xf32>
    %275 = arith.mulf %274, %270 : vector<16x64xf32>
    %276 = arith.mulf %275, %270 : vector<16x64xf32>
    %277 = arith.addf %270, %276 : vector<16x64xf32>
    %cst_120 = arith.constant 0.797884583 : f32
    %278 = vector.broadcast %cst_120 : f32 to vector<16x64xf32>
    %279 = arith.mulf %278, %277 : vector<16x64xf32>
    %280 = math.tanh %279 : vector<16x64xf32>
    %cst_121 = arith.constant 1.000000e+00 : f32
    %281 = vector.broadcast %cst_121 : f32 to vector<16x64xf32>
    %282 = arith.addf %281, %280 : vector<16x64xf32>
    %283 = arith.mulf %272, %282 : vector<16x64xf32>
    %c1_122 = arith.constant 1 : index
    %c0_123 = arith.constant 0 : index
    %c0_124 = arith.constant 0 : index
    %284 = vector.load %arg13[%c1_122, %c0_123, %c0_124] : memref<2x64x32xbf16, #tpu.memory_space<vmem>>, vector<1x64x32xbf16>
    %285 = vector.shape_cast %284 : vector<1x64x32xbf16> to vector<64x32xbf16>
    %286 = arith.truncf %283 : vector<16x64xf32> to vector<16x64xbf16>
    %cst_125 = arith.constant dense<0.000000e+00> : vector<16x32xf32>
    %287 = tpu.matmul %286, %285, %cst_125 {dimension_numbers = #tpu.dot_dimension_numbers<[1], [0], [0], [1], [0, 0, 1, 1], [], []>} : vector<16x64xbf16>, vector<64x32xbf16>, vector<16x32xf32> -> vector<16x32xf32>
    %c1_126 = arith.constant 1 : index
    %c0_127 = arith.constant 0 : index
    %c0_128 = arith.constant 0 : index
    %288 = vector.load %arg14[%c1_126, %c0_127, %c0_128] : memref<2x1x32xf32, #tpu.memory_space<vmem>>, vector<1x1x32xf32>
    %289 = vector.shape_cast %288 : vector<1x1x32xf32> to vector<1x32xf32>
    %290 = vector.broadcast %289 : vector<1x32xf32> to vector<16x32xf32>
    %291 = arith.addf %287, %290 : vector<16x32xf32>
    %292 = arith.addf %291, %262 : vector<16x32xf32>
    %c1_129 = arith.constant 1 : index
    %c0_130 = arith.constant 0 : index
    %c0_131 = arith.constant 0 : index
    %293 = vector.load %arg15[%c1_129, %c0_130, %c0_131] : memref<2x1x32xf32, #tpu.memory_space<vmem>>, vector<1x1x32xf32>
    %294 = vector.shape_cast %293 : vector<1x1x32xf32> to vector<1x32xf32>
    %c1_132 = arith.constant 1 : index
    %c0_133 = arith.constant 0 : index
    %c0_134 = arith.constant 0 : index
    %295 = vector.load %arg16[%c1_132, %c0_133, %c0_134] : memref<2x1x32xf32, #tpu.memory_space<vmem>>, vector<1x1x32xf32>
    %296 = vector.shape_cast %295 : vector<1x1x32xf32> to vector<1x32xf32>
    %cst_135 = arith.constant dense<0.000000e+00> : vector<16xf32>
    %297 = vector.multi_reduction <add>, %292, %cst_135 [1] : vector<16x32xf32> to vector<16xf32>
    %298 = vector.shape_cast %297 : vector<16xf32> to vector<16x1xf32>
    %cst_136 = arith.constant 3.200000e+01 : f32
    %299 = vector.broadcast %cst_136 : f32 to vector<16x1xf32>
    %300 = arith.divf %298, %299 : vector<16x1xf32>
    %301 = vector.broadcast %300 : vector<16x1xf32> to vector<16x32xf32>
    %302 = arith.subf %292, %301 : vector<16x32xf32>
    %303 = arith.mulf %302, %302 : vector<16x32xf32>
    %cst_137 = arith.constant dense<0.000000e+00> : vector<16xf32>
    %304 = vector.multi_reduction <add>, %303, %cst_137 [1] : vector<16x32xf32> to vector<16xf32>
    %305 = vector.shape_cast %304 : vector<16xf32> to vector<16x1xf32>
    %cst_138 = arith.constant 3.200000e+01 : f32
    %306 = vector.broadcast %cst_138 : f32 to vector<16x1xf32>
    %307 = arith.divf %305, %306 : vector<16x1xf32>
    %cst_139 = arith.constant 9.99999996E-13 : f32
    %308 = vector.broadcast %cst_139 : f32 to vector<16x1xf32>
    %309 = arith.addf %307, %308 : vector<16x1xf32>
    %310 = math.rsqrt %309 : vector<16x1xf32>
    %311 = vector.broadcast %310 : vector<16x1xf32> to vector<16x32xf32>
    %312 = arith.mulf %302, %311 : vector<16x32xf32>
    %313 = vector.broadcast %294 : vector<1x32xf32> to vector<16x32xf32>
    %314 = arith.mulf %312, %313 : vector<16x32xf32>
    %315 = vector.broadcast %296 : vector<1x32xf32> to vector<16x32xf32>
    %316 = arith.addf %314, %315 : vector<16x32xf32>
    %317 = vector.extract_strided_slice %316 {offsets = [0, 0], sizes = [1, 32], strides = [1, 1]} : vector<16x32xf32> to vector<1x32xf32>
    %318 = vector.extract_strided_slice %316 {offsets = [8, 0], sizes = [1, 32], strides = [1, 1]} : vector<16x32xf32> to vector<1x32xf32>
    %319 = tpu.concatenate %317, %318 in 0 : vector<1x32xf32>, vector<1x32xf32> -> vector<2x32xf32>
    %c0_140 = arith.constant 0 : index
    %c0_141 = arith.constant 0 : index
    %320 = vector.load %arg17[%c0_140, %c0_141] : memref<32x32xbf16, #tpu.memory_space<vmem>>, vector<32x32xbf16>
    %321 = arith.truncf %319 : vector<2x32xf32> to vector<2x32xbf16>
    %cst_142 = arith.constant dense<0.000000e+00> : vector<2x32xf32>
    %322 = tpu.matmul %321, %320, %cst_142 {dimension_numbers = #tpu.dot_dimension_numbers<[1], [0], [0], [1], [0, 0, 1, 1], [], []>} : vector<2x32xbf16>, vector<32x32xbf16>, vector<2x32xf32> -> vector<2x32xf32>
    %c0_143 = arith.constant 0 : index
    %c0_144 = arith.constant 0 : index
    %323 = vector.load %arg18[%c0_143, %c0_144] : memref<1x32xf32, #tpu.memory_space<vmem>>, vector<1x32xf32>
    %324 = vector.broadcast %323 : vector<1x32xf32> to vector<2x32xf32>
    %325 = arith.addf %322, %324 : vector<2x32xf32>
    %326 = math.tanh %325 : vector<2x32xf32>
    %c0_145 = arith.constant 0 : index
    %c0_146 = arith.constant 0 : index
    %327 = vector.load %arg19[%c0_145, %c0_146] : memref<32x2xbf16, #tpu.memory_space<vmem>>, vector<32x2xbf16>
    %328 = arith.truncf %326 : vector<2x32xf32> to vector<2x32xbf16>
    %cst_147 = arith.constant dense<0.000000e+00> : vector<2x2xf32>
    %329 = tpu.matmul %328, %327, %cst_147 {dimension_numbers = #tpu.dot_dimension_numbers<[1], [0], [0], [1], [0, 0, 1, 1], [], []>} : vector<2x32xbf16>, vector<32x2xbf16>, vector<2x2xf32> -> vector<2x2xf32>
    %c0_148 = arith.constant 0 : index
    %c0_149 = arith.constant 0 : index
    %330 = vector.load %arg20[%c0_148, %c0_149] : memref<1x2xf32, #tpu.memory_space<vmem>>, vector<1x2xf32>
    %331 = vector.broadcast %330 : vector<1x2xf32> to vector<2x2xf32>
    %332 = arith.addf %329, %331 : vector<2x2xf32>
    %c0_150 = arith.constant 0 : index
    %c0_151 = arith.constant 0 : index
    %333 = vector.load %arg22[%c0_150, %c0_151] : memref<2x2xf32, #tpu.memory_space<vmem>>, vector<2x2xf32>
    tpu.vector_store %arg22[%c0_150, %c0_151], %332 {strides = array<i32>} : memref<2x2xf32, #tpu.memory_space<vmem>>, vector<2x2xf32>,
    %cst_152 = arith.constant dense<0xFF800000> : vector<2xf32>
    %334 = vector.multi_reduction <maximumf>, %332, %cst_152 [1] : vector<2x2xf32> to vector<2xf32>
    %335 = vector.shape_cast %334 : vector<2xf32> to vector<2x1xf32>
    %336 = vector.broadcast %335 : vector<2x1xf32> to vector<2x2xf32>
    %337 = arith.subf %332, %336 : vector<2x2xf32>
    %338 = math.exp %337 : vector<2x2xf32>
    %cst_153 = arith.constant dense<0.000000e+00> : vector<2xf32>
    %339 = vector.multi_reduction <add>, %338, %cst_153 [1] : vector<2x2xf32> to vector<2xf32>
    %340 = vector.shape_cast %339 : vector<2xf32> to vector<2x1xf32>
    %341 = tpu.reciprocal %340 {approx = true} : vector<2x1xf32> -> vector<2x1xf32>
    %342 = vector.broadcast %341 : vector<2x1xf32> to vector<2x2xf32>
    %343 = arith.mulf %338, %342 : vector<2x2xf32>
    %c0_154 = arith.constant 0 : index
    %c0_155 = arith.constant 0 : index
    %344 = vector.load %arg23[%c0_154, %c0_155] : memref<2x2xf32, #tpu.memory_space<vmem>>, vector<2x2xf32>
    tpu.vector_store %arg23[%c0_154, %c0_155], %343 {strides = array<i32>} : memref<2x2xf32, #tpu.memory_space<vmem>>, vector<2x2xf32>,
    %345 = vector.broadcast %335 : vector<2x1xf32> to vector<2x2xf32>
    %346 = arith.subf %332, %345 : vector<2x2xf32>
    %347 = math.log %340 : vector<2x1xf32>
    %348 = vector.broadcast %347 : vector<2x1xf32> to vector<2x2xf32>
    %349 = arith.subf %346, %348 : vector<2x2xf32>
    %c0_156 = arith.constant 0 : index
    %c0_157 = arith.constant 0 : index
    %350 = vector.load %arg2[%c0_156, %c0_157] : memref<2x2xf32, #tpu.memory_space<vmem>>, vector<2x2xf32>
    %351 = arith.mulf %350, %349 : vector<2x2xf32>
    %cst_158 = arith.constant dense<0.000000e+00> : vector<2xf32>
    %352 = vector.multi_reduction <add>, %351, %cst_158 [1] : vector<2x2xf32> to vector<2xf32>
    %353 = vector.shape_cast %352 : vector<2xf32> to vector<2x1xf32>
    %cst_159 = arith.constant 0.000000e+00 : f32
    %354 = vector.broadcast %cst_159 : f32 to vector<2x1xf32>
    %355 = arith.subf %354, %353 : vector<2x1xf32>
    %356 = vector.shape_cast %355 : vector<2x1xf32> to vector<1x2x1xf32>
    %cst_160 = arith.constant dense<0.000000e+00> : vector<1xf32>
    %357 = vector.multi_reduction <add>, %356, %cst_160 [1, 2] : vector<1x2x1xf32> to vector<1xf32>
    %358 = vector.shape_cast %357 : vector<1xf32> to vector<1x1x1xf32>
    %359 = vector.extract %358[0, 0, 0] : f32 from vector<1x1x1xf32>
    %360 = vector.broadcast %359 : f32 to vector<1x1xf32>
    %cst_161 = arith.constant 2.000000e+00 : f32
    %361 = vector.broadcast %cst_161 : f32 to vector<1x1xf32>
    %362 = arith.divf %360, %361 : vector<1x1xf32>
    %c0_162 = arith.constant 0 : index
    %c0_163 = arith.constant 0 : index
    %363 = vector.load %arg21[%c0_162, %c0_163] : memref<1x1xf32, #tpu.memory_space<vmem>>, vector<1x1xf32>
    tpu.vector_store %arg21[%c0_162, %c0_163], %362 {strides = array<i32>} : memref<1x1xf32, #tpu.memory_space<vmem>>, vector<1x1xf32>,
    return
  }
}

</mosaic_0001>

<llo_original>
// kernel: bert_forward.1
$region0: #{bert_forward.1}
  #allocation0 [shape = 'u32[]', space=smem, size = 0x4, offset = 0x4, fixed_abs, tag = 'smem constant byte address 0x4 - core index']
  #allocation1 [shape = 'u32[144,128]{1,0:T(1,128)}', space=vmem, size = 0x12000, scoped, tag = 'internal scratch']
  %s0 = inlined_call_operand.vmem [shape: f32[16,32], index: 0, kind: input, shape index: {}]
  %s1 = inlined_call_operand.vmem [shape: f32[2,8], index: 1, kind: input, shape index: {}]
  %s2 = inlined_call_operand.vmem [shape: f32[2,2], index: 2, kind: input, shape index: {}]
  %s3 = inlined_call_operand.vmem [shape: f32[1,32], index: 3, kind: input, shape index: {}]
  %s4 = inlined_call_operand.vmem [shape: f32[1,32], index: 4, kind: input, shape index: {}]
  %s5 = inlined_call_operand.vmem [shape: bf16[2,32,96], index: 5, kind: input, shape index: {}]
  %s6 = inlined_call_operand.vmem [shape: f32[2,1,96], index: 6, kind: input, shape index: {}]
  %s7 = inlined_call_operand.vmem [shape: bf16[2,32,32], index: 7, kind: input, shape index: {}]
  %s8 = inlined_call_operand.vmem [shape: f32[2,1,32], index: 8, kind: input, shape index: {}]
  %s9 = inlined_call_operand.vmem [shape: f32[2,1,32], index: 9, kind: input, shape index: {}]
  %s10 = inlined_call_operand.vmem [shape: f32[2,1,32], index: 10, kind: input, shape index: {}]
  %s11 = inlined_call_operand.vmem [shape: bf16[2,32,64], index: 11, kind: input, shape index: {}]
  %s12 = inlined_call_operand.vmem [shape: f32[2,1,64], index: 12, kind: input, shape index: {}]
  %s13 = inlined_call_operand.vmem [shape: bf16[2,64,32], index: 13, kind: input, shape index: {}]
  %s14 = inlined_call_operand.vmem [shape: f32[2,1,32], index: 14, kind: input, shape index: {}]
  %s15 = inlined_call_operand.vmem [shape: f32[2,1,32], index: 15, kind: input, shape index: {}]
  %s16 = inlined_call_operand.vmem [shape: f32[2,1,32], index: 16, kind: input, shape index: {}]
  %s17 = inlined_call_operand.vmem [shape: bf16[32,32], index: 17, kind: input, shape index: {}]
  %s18 = inlined_call_operand.vmem [shape: f32[1,32], index: 18, kind: input, shape index: {}]
  %s19 = inlined_call_operand.vmem [shape: bf16[32,2], index: 19, kind: input, shape index: {}]
  %s20 = inlined_call_operand.vmem [shape: f32[1,2], index: 20, kind: input, shape index: {}]
  %s21 = inlined_call_operand.hbm [shape: f32[1,1], index: 21, kind: output, shape index: {0}]
  %s22 = inlined_call_operand.hbm [shape: f32[2,2], index: 22, kind: output, shape index: {1}]
  %s23 = inlined_call_operand.hbm [shape: f32[2,2], index: 23, kind: output, shape index: {2}]
  %24 = xla_tuple %s21, %s22, %s23
  %s25 = sld [smem:[#allocation0]]
  $region110: #{bert_forward.1} parent=0
    _
  %s27 = ssub.s32 1, %s25
  %s28 = scalar_select 0, %s27, %s25
  $region1: #{bert_forward.1} parent=0
    #allocation2 [shape = 'u8[512]{0}', space=vmem, size = 0x400, scoped, tag = 'output window, operand 0, single buffered']
    #allocation3 [shape = 's32[1]{0}', space=sflag, size = 0x4, scoped, tag = 'scoped memory for bert_forward.1']
    #allocation4 [shape = 'u8[1024]{0}', space=vmem, size = 0x400, scoped, tag = 'output window, operand 1, single buffered']
    #allocation5 [shape = 's32[1]{0}', space=sflag, size = 0x4, scoped, tag = 'scoped memory for bert_forward.1']
    #allocation6 [shape = 'u8[1024]{0}', space=vmem, size = 0x400, scoped, tag = 'output window, operand 2, single buffered']
    %29 = vsyncpa [#allocation3], 0
    %30 = vsyncpa [#allocation5], 0
    // Predicated region
    $region2: #{bert_forward.1} parent=1 // pred_check
      _
    $region3: #{bert_forward.1} parent=1 // pred_check_branch
      %32 = sbr.rel (0) target = $region5
    $region4: #{bert_forward.1} parent=1 // pred_region
      _
    $region5: #{bert_forward.1} parent=1 // pred_fallthru
      _
    // Predicated region
    $region6: #{bert_forward.1} parent=1 // pred_check
      _
    $region7: #{bert_forward.1} parent=1 // pred_check_branch
      %34 = sbr.rel (0) target = $region9
    $region8: #{bert_forward.1} parent=1 // pred_region
      _
    $region9: #{bert_forward.1} parent=1 // pred_fallthru
      _
    // Predicated region
    $region10: #{bert_forward.1} parent=1 // pred_check
      _
    $region11: #{bert_forward.1} parent=1 // pred_check_branch
      %36 = sbr.rel (0) target = $region13
    $region12: #{bert_forward.1} parent=1 // pred_region
      _
    $region13: #{bert_forward.1} parent=1 // pred_fallthru
      _
    // Predicated region
    $region14: #{bert_forward.1} parent=1 // pred_check
      _
    $region15: #{bert_forward.1} parent=1 // pred_check_branch
      %38 = sbr.rel (0) target = $region17
    $region16: #{bert_forward.1} parent=1 // pred_region
      _
    $region17: #{bert_forward.1} parent=1 // pred_fallthru
      _
    // Predicated region
    $region18: #{bert_forward.1} parent=1 // pred_check
      _
    $region19: #{bert_forward.1} parent=1 // pred_check_branch
      %40 = sbr.rel (0) target = $region21
    $region20: #{bert_forward.1} parent=1 // pred_region
      _
    $region21: #{bert_forward.1} parent=1 // pred_fallthru
      _
    // Predicated region
    $region22: #{bert_forward.1} parent=1 // pred_check
      _
    $region23: #{bert_forward.1} parent=1 // pred_check_branch
      %42 = sbr.rel (0) target = $region25
    $region24: #{bert_forward.1} parent=1 // pred_region
      _
    $region25: #{bert_forward.1} parent=1 // pred_fallthru
      _
    // Predicated region
    $region26: #{bert_forward.1} parent=1 // pred_check
      _
    $region27: #{bert_forward.1} parent=1 // pred_check_branch
      %44 = sbr.rel (0) target = $region29
    $region28: #{bert_forward.1} parent=1 // pred_region
      _
    $region29: #{bert_forward.1} parent=1 // pred_fallthru
      _
    // Predicated region
    $region30: #{bert_forward.1} parent=1 // pred_check
      _
    $region31: #{bert_forward.1} parent=1 // pred_check_branch
      %46 = sbr.rel (0) target = $region33
    $region32: #{bert_forward.1} parent=1 // pred_region
      _
    $region33: #{bert_forward.1} parent=1 // pred_fallthru
      _
    // Predicated region
    $region34: #{bert_forward.1} parent=1 // pred_check
      _
    $region35: #{bert_forward.1} parent=1 // pred_check_branch
      %48 = sbr.rel (0) target = $region37
    $region36: #{bert_forward.1} parent=1 // pred_region
      _
    $region37: #{bert_forward.1} parent=1 // pred_fallthru
      _
    // Predicated region
    $region38: #{bert_forward.1} parent=1 // pred_check
      _
    $region39: #{bert_forward.1} parent=1 // pred_check_branch
      %50 = sbr.rel (0) target = $region41
    $region40: #{bert_forward.1} parent=1 // pred_region
      _
    $region41: #{bert_forward.1} parent=1 // pred_fallthru
      _
    // Predicated region
    $region42: #{bert_forward.1} parent=1 // pred_check
      _
    $region43: #{bert_forward.1} parent=1 // pred_check_branch
      %52 = sbr.rel (0) target = $region45
    $region44: #{bert_forward.1} parent=1 // pred_region
      _
    $region45: #{bert_forward.1} parent=1 // pred_fallthru
      _
    // Predicated region
    $region46: #{bert_forward.1} parent=1 // pred_check
      _
    $region47: #{bert_forward.1} parent=1 // pred_check_branch
      %54 = sbr.rel (0) target = $region49
    $region48: #{bert_forward.1} parent=1 // pred_region
      _
    $region49: #{bert_forward.1} parent=1 // pred_fallthru
      _
    // Predicated region
    $region50: #{bert_forward.1} parent=1 // pred_check
      _
    $region51: #{bert_forward.1} parent=1 // pred_check_branch
      %56 = sbr.rel (0) target = $region53
    $region52: #{bert_forward.1} parent=1 // pred_region
      _
    $region53: #{bert_forward.1} parent=1 // pred_fallthru
      _
    // Predicated region
    $region54: #{bert_forward.1} parent=1 // pred_check
      _
    $region55: #{bert_forward.1} parent=1 // pred_check_branch
      %58 = sbr.rel (0) target = $region57
    $region56: #{bert_forward.1} parent=1 // pred_region
      _
    $region57: #{bert_forward.1} parent=1 // pred_fallthru
      _
    // Predicated region
    $region58: #{bert_forward.1} parent=1 // pred_check
      _
    $region59: #{bert_forward.1} parent=1 // pred_check_branch
      %60 = sbr.rel (0) target = $region61
    $region60: #{bert_forward.1} parent=1 // pred_region
      _
    $region61: #{bert_forward.1} parent=1 // pred_fallthru
      _
    // Predicated region
    $region62: #{bert_forward.1} parent=1 // pred_check
      _
    $region63: #{bert_forward.1} parent=1 // pred_check_branch
      %62 = sbr.rel (0) target = $region65
    $region64: #{bert_forward.1} parent=1 // pred_region
      _
    $region65: #{bert_forward.1} parent=1 // pred_fallthru
      _
    // Predicated region
    $region66: #{bert_forward.1} parent=1 // pred_check
      _
    $region67: #{bert_forward.1} parent=1 // pred_check_branch
      %64 = sbr.rel (0) target = $region69
    $region68: #{bert_forward.1} parent=1 // pred_region
      _
    $region69: #{bert_forward.1} parent=1 // pred_fallthru
      _
    // Predicated region
    $region70: #{bert_forward.1} parent=1 // pred_check
      _
    $region71: #{bert_forward.1} parent=1 // pred_check_branch
      %66 = sbr.rel (0) target = $region73
    $region72: #{bert_forward.1} parent=1 // pred_region
      _
    $region73: #{bert_forward.1} parent=1 // pred_fallthru
      _
    // Predicated region
    $region74: #{bert_forward.1} parent=1 // pred_check
      _
    $region75: #{bert_forward.1} parent=1 // pred_check_branch
      %68 = sbr.rel (0) target = $region77
    $region76: #{bert_forward.1} parent=1 // pred_region
      _
    $region77: #{bert_forward.1} parent=1 // pred_fallthru
      _
    // Predicated region
    $region78: #{bert_forward.1} parent=1 // pred_check
      _
    $region79: #{bert_forward.1} parent=1 // pred_check_branch
      %70 = sbr.rel (0) target = $region81
    $region80: #{bert_forward.1} parent=1 // pred_region
      _
    $region81: #{bert_forward.1} parent=1 // pred_fallthru
      _
    // Predicated region
    $region82: #{bert_forward.1} parent=1 // pred_check
      _
    $region83: #{bert_forward.1} parent=1 // pred_check_branch
      %72 = sbr.rel (0) target = $region85
    $region84: #{bert_forward.1} parent=1 // pred_region
      _
    $region85: #{bert_forward.1} parent=1 // pred_fallthru
      _
    %v74 = vld [vmem:[%s0] sm:$0xff]
    %v75 = vld [vmem:[%s0 + $0x8] sm:$0xff]
    %v76 = vld [vmem:[%s3] sm:$0x1]
    %v77 = vld [vmem:[%s4] sm:$0x1]
    %vm78 = vcmask 261120
    %v79 = vsel %vm78, %v74, 0.0
    %80 = vadd.xlane.f32.xlu0 %v79
    %v81 = vpop.xlane.xlu0 %80
    %v82 = vsel %vm78, %v75, 0.0
    %83 = vadd.xlane.f32.xlu0 %v82
    %v84 = vpop.xlane.xlu0 %83
    %v85 = vrcp.pop 32.0
    %v86 = vmul.f32 %v81, %v85
    %v87 = vmul.f32 %v84, %v85
    %v88 = vsub.f32 %v74, %v86
    %v89 = vsub.f32 %v75, %v87
    %v90 = vmul.f32 %v88, %v88
    %v91 = vmul.f32 %v89, %v89
    %v92 = vsel %vm78, %v90, 0.0
    %93 = vadd.xlane.f32.xlu0 %v92
    %v94 = vpop.xlane.xlu0 %93
    %v95 = vsel %vm78, %v91, 0.0
    %96 = vadd.xlane.f32.xlu0 %v95
    %v97 = vpop.xlane.xlu0 %96
    %v98 = vmul.f32 %v94, %v85
    %v99 = vmul.f32 %v97, %v85
    %v100 = vadd.f32 %v98, 1e-12
    %v101 = vadd.f32 %v99, 1e-12
    %v102 = vrsqrt.pop %v100
    %v103 = vrsqrt.pop %v101
    %v104 = vmul.f32 %v88, %v102
    %v105 = vmul.f32 %v89, %v103
    %v107 = vlaneseq
    %v108 = vshrl.u32 %v107, 7
    %v109 = vsub.s32 0, %v108
    %v110 = vrot.slane %v76, %v109
    %v112 = vmul.f32 %v104, %v110
    %v113 = vmul.f32 %v105, %v110
    %v115 = vlaneseq
    %v116 = vshrl.u32 %v115, 7
    %v117 = vsub.s32 0, %v116
    %v118 = vrot.slane %v77, %v117
    %v120 = vadd.f32 %v112, %v118
    %v121 = vadd.f32 %v113, %v118
    %v122 = vld [vmem:[%s1] sm:$0x3]
    %v123 = vsub.f32 1.0, %v122
    %v124 = vmul.f32 %v123, -10000.0
    %v127 = vunpack.c.l.s4 1966171168
    %v128 = vunpack.c.0.s8 %v127
    %v129 = vlaneseq
    %v130 = vshrl.u32 %v129, 7
    %v131 = vsub.s32 %v128, %v130
    %v132 = vrot.slane %v124, %v131
    %v133 = vcombine.high %v132, %v132
    %v135 = vunpack.c.l.s4 1966171168
    %v136 = vunpack.c.0.s8 %v135
    %v137 = vlaneseq
    %v138 = vshrl.u32 %v137, 7
    %v139 = vsub.s32 %v136, %v138
    %v140 = vrot.slane %v132, %v139
    %v142 = vunpack.c.l.s4 1966171168
    %v143 = vunpack.c.0.s8 %v142
    %v144 = vlaneseq
    %v145 = vshrl.u32 %v144, 7
    %v146 = vsub.s32 %v143, %v145
    %v147 = vrot.slane %v133, %v146
    %v148 = vld [vmem:[%s5] sm:$0xf]
    %v149 = vld [vmem:[%s5 + $0x4] sm:$0xf]
    %v150 = vld [vmem:[%s5 + $0x8] sm:$0xf]
    %v151 = vld [vmem:[%s5 + $0xc] sm:$0xf]
    %v152 = vpack.c.bf16 %v121, %v120
    %v153 = vld [vmem:[%s6] sm:$0x1]
    %v155 = vlaneseq
    %v156 = vshrl.u32 %v155, 7
    %v157 = vsub.s32 0, %v156
    %v158 = vrot.slane %v153, %v157
    %v164 = vunpack.c.l.b16 %v148
    %v165 = vunpack.c.l.b16 %v149
    %v166 = vunpack.c.l.b16 %v150
    %v167 = vunpack.c.l.b16 %v151
    %v168 = vpack.c.b16 %v165, %v164
    %v169 = vpack.c.b16 %v167, %v166
    %v173 = vsel %vm78, %v152, 0
    %175 = vmatprep.subr.bf16.mxu0 0
    %176 = vmatpush1.bf16.msra.mxu0 0
    %177 = vmatprep.subr.bf16.mxu0 0
    %178 = vmatpush1.bf16.msra.mxu0 0
    %179 = vmatprep.subr.bf16.mxu0 0
    %180 = vmatpush1.bf16.msra.mxu0 0
    %181 = vmatprep.subr.bf16.mxu0 0
    %182 = vmatpush1.bf16.msra.mxu0 0
    %183 = vmatprep.subr.bf16.mxu0 0
    %184 = vmatpush1.bf16.msra.mxu0 0
    %185 = vmatprep.subr.bf16.mxu0 0
    %186 = vmatpush1.bf16.msra.mxu0 0
    %187 = vmatprep.subr.bf16.mxu0 0
    %188 = vmatpush1.bf16.msra.mxu0 %v169
    %189 = vmatprep.subr.bf16.mxu0 0
    %190 = vmatpush1.bf16.msra.mxu0 %v168
    %191 = vmatprep.subr.bf16.mxu0 0
    %192 = vmatpush2.bf16.msra.mxu0 0
    %193 = vmatprep.subr.bf16.mxu0 0
    %194 = vmatpush2.bf16.msra.mxu0 0
    %195 = vmatprep.subr.bf16.mxu0 0
    %196 = vmatpush2.bf16.msra.mxu0 0
    %197 = vmatprep.subr.bf16.mxu0 0
    %198 = vmatpush2.bf16.msra.mxu0 0
    %199 = vmatprep.subr.bf16.mxu0 0
    %200 = vmatpush2.bf16.msra.mxu0 0
    %201 = vmatprep.subr.bf16.mxu0 0
    %202 = vmatpush2.bf16.msra.mxu0 0
    %203 = vmatprep.subr.bf16.mxu0 0
    %204 = vmatpush2.bf16.msra.mxu0 0
    %205 = vmatprep.subr.bf16.mxu0 0
    %206 = vmatpush2.bf16.msra.mxu0 0
    %207 = vmatprep.mubr.bf16.mxu0 0
    %208 = vmatmul.mubr.bf16.gmra.mxu0 %v173
    %v209 = vpop.f32.mrf.mxu0
    %v210 = vadd.f32 %v158, %v209
    %v211 = vpop.f32.mrf.mxu0
    %v212 = vpop.f32.mrf.mxu0
    %v213 = vadd.f32 %v158, %v212
    %v214 = vpop.f32.mrf.mxu0
    %215 = vdwg.mxu0
    %v216 = vpack.c.bf16 %v210, %v210
    %v217 = vpack.c.bf16 %v213, %v213
    %219 = vrot.lane.b32.xlu0 %v216, 96
    %v220 = vpop.permute.xlu0 %219
    %vm221 = vcmask 130048
    %v223 = vsel %vm221, %v216, 0
    %v226 = vsel %vm221, %v220, 0
    %228 = vmatprep.subr.bf16.mxu0 0
    %229 = vmatpush1.bf16.xpose.msra.mxu0 0
    %230 = vmatprep.subr.bf16.mxu0 0
    %231 = vmatpush1.bf16.xpose.msra.mxu0 0
    %232 = vmatprep.subr.bf16.mxu0 0
    %233 = vmatpush1.bf16.xpose.msra.mxu0 0
    %234 = vmatprep.subr.bf16.mxu0 0
    %235 = vmatpush1.bf16.xpose.msra.mxu0 0
    %236 = vmatprep.subr.bf16.mxu0 0
    %237 = vmatpush1.bf16.xpose.msra.mxu0 0
    %238 = vmatprep.subr.bf16.mxu0 0
    %239 = vmatpush1.bf16.xpose.msra.mxu0 0
    %240 = vmatprep.subr.bf16.mxu0 0
    %241 = vmatpush1.bf16.xpose.msra.mxu0 0
    %242 = vmatprep.subr.bf16.mxu0 0
    %243 = vmatpush1.bf16.xpose.msra.mxu0 %v226
    %244 = vmatprep.subr.bf16.mxu0 0
    %245 = vmatpush2.bf16.xpose.msra.mxu0 0
    %246 = vmatprep.subr.bf16.mxu0 0
    %247 = vmatpush2.bf16.xpose.msra.mxu0 0
    %248 = vmatprep.subr.bf16.mxu0 0
    %249 = vmatpush2.bf16.xpose.msra.mxu0 0
    %250 = vmatprep.subr.bf16.mxu0 0
    %251 = vmatpush2.bf16.xpose.msra.mxu0 0
    %252 = vmatprep.subr.bf16.mxu0 0
    %253 = vmatpush2.bf16.xpose.msra.mxu0 0
    %254 = vmatprep.subr.bf16.mxu0 0
    %255 = vmatpush2.bf16.xpose.msra.mxu0 0
    %256 = vmatprep.subr.bf16.mxu0 0
    %257 = vmatpush2.bf16.xpose.msra.mxu0 0
    %258 = vmatprep.subr.bf16.mxu0 0
    %259 = vmatpush2.bf16.xpose.msra.mxu0 0
    %260 = vmatprep.mubr.bf16.mxu0 0
    %261 = vmatmul.mubr.bf16.gmra.mxu0 %v223
    %v262 = vpop.f32.mrf.mxu0
    %v263 = vadd.f32 0.0, %v262
    %v264 = vpop.f32.mrf.mxu0
    %v265 = vpop.f32.mrf.mxu0
    %v266 = vpop.f32.mrf.mxu0
    %267 = vdwg.mxu0
    %269 = vrot.lane.b32.xlu0 %v217, 96
    %v270 = vpop.permute.xlu0 %269
    %v272 = vsel %vm221, %v217, 0
    %v275 = vsel %vm221, %v270, 0
    %277 = vmatprep.subr.bf16.mxu0 0
    %278 = vmatpush1.bf16.xpose.msra.mxu0 0
    %279 = vmatprep.subr.bf16.mxu0 0
    %280 = vmatpush1.bf16.xpose.msra.mxu0 0
    %281 = vmatprep.subr.bf16.mxu0 0
    %282 = vmatpush1.bf16.xpose.msra.mxu0 0
    %283 = vmatprep.subr.bf16.mxu0 0
    %284 = vmatpush1.bf16.xpose.msra.mxu0 0
    %285 = vmatprep.subr.bf16.mxu0 0
    %286 = vmatpush1.bf16.xpose.msra.mxu0 0
    %287 = vmatprep.subr.bf16.mxu0 0
    %288 = vmatpush1.bf16.xpose.msra.mxu0 0
    %289 = vmatprep.subr.bf16.mxu0 0
    %290 = vmatpush1.bf16.xpose.msra.mxu0 0
    %291 = vmatprep.subr.bf16.mxu0 0
    %292 = vmatpush1.bf16.xpose.msra.mxu0 %v275
    %293 = vmatprep.subr.bf16.mxu0 0
    %294 = vmatpush2.bf16.xpose.msra.mxu0 0
    %295 = vmatprep.subr.bf16.mxu0 0
    %296 = vmatpush2.bf16.xpose.msra.mxu0 0
    %297 = vmatprep.subr.bf16.mxu0 0
    %298 = vmatpush2.bf16.xpose.msra.mxu0 0
    %299 = vmatprep.subr.bf16.mxu0 0
    %300 = vmatpush2.bf16.xpose.msra.mxu0 0
    %301 = vmatprep.subr.bf16.mxu0 0
    %302 = vmatpush2.bf16.xpose.msra.mxu0 0
    %303 = vmatprep.subr.bf16.mxu0 0
    %304 = vmatpush2.bf16.xpose.msra.mxu0 0
    %305 = vmatprep.subr.bf16.mxu0 0
    %306 = vmatpush2.bf16.xpose.msra.mxu0 0
    %307 = vmatprep.subr.bf16.mxu0 0
    %308 = vmatpush2.bf16.xpose.msra.mxu0 0
    %309 = vmatprep.mubr.bf16.mxu0 0
    %310 = vmatmul.mubr.bf16.gmra.mxu0 %v272
    %v311 = vpop.f32.mrf.mxu0
    %v312 = vadd.f32 0.0, %v311
    %v313 = vpop.f32.mrf.mxu0
    %v314 = vpop.f32.mrf.mxu0
    %v315 = vpop.f32.mrf.mxu0
    %316 = vdwg.mxu0
    %v317 = vmul.f32 %v263, 0.25
    %v318 = vmul.f32 %v312, 0.25
    %v319 = vlaneseq
    %v320 = vshrl.u32 %v319, 7
    %v321 = vsub.s32 0, %v320
    %v322 = vrot.slane %v140, %v321
    %v323 = vlaneseq
    %v324 = vshrl.u32 %v323, 7
    %v325 = vsub.s32 0, %v324
    %v326 = vrot.slane %v147, %v325
    %v329 = vadd.f32 %v317, %v322
    %v330 = vadd.f32 %v318, %v326
    %vm331 = vcmask 64512
    %v332 = vsel %vm331, %v329, -inf
    %333 = vmax.xlane.f32.xlu0 %v332
    %v334 = vpop.xlane.xlu0 %333
    %v335 = vsel %vm331, %v330, -inf
    %336 = vmax.xlane.f32.xlu0 %v335
    %v337 = vpop.xlane.xlu0 %336
    %v338 = vsub.f32 %v329, %v334
    %v339 = vsub.f32 %v330, %v337
    %v340 = vmul.f32 %v338, 1.442695
    %v341 = vpow.pop %v340
    %v342 = vmul.f32 %v339, 1.442695
    %v343 = vpow.pop %v342
    %v344 = vsel %vm331, %v341, 0.0
    %345 = vadd.xlane.f32.xlu0 %v344
    %v346 = vpop.xlane.xlu0 %345
    %v347 = vsel %vm331, %v343, 0.0
    %348 = vadd.xlane.f32.xlu0 %v347
    %v349 = vpop.xlane.xlu0 %348
    %v350 = vrcp.pop %v346
    %v351 = vrcp.pop %v349
    %v352 = vmul.f32 %v341, %v350
    %v353 = vmul.f32 %v343, %v351
    %v354 = vpack.c.bf16 %v352, %v352
    %v355 = vpack.c.bf16 %v353, %v353
    %356 = vrot.lane.b32.xlu0 %v216, 64
    %v357 = vpop.permute.xlu0 %356
    %v359 = vsel %vm331, %v354, 0
    %vm361 = vcmask 1043456
    %v363 = vsel %vm361, %v357, 0
    %365 = vmatprep.subr.bf16.mxu0 0
    %366 = vmatpush1.bf16.msra.mxu0 0
    %367 = vmatprep.subr.bf16.mxu0 0
    %368 = vmatpush1.bf16.msra.mxu0 0
    %369 = vmatprep.subr.bf16.mxu0 0
    %370 = vmatpush1.bf16.msra.mxu0 0
    %371 = vmatprep.subr.bf16.mxu0 0
    %372 = vmatpush1.bf16.msra.mxu0 0
    %373 = vmatprep.subr.bf16.mxu0 0
    %374 = vmatpush1.bf16.msra.mxu0 0
    %375 = vmatprep.subr.bf16.mxu0 0
    %376 = vmatpush1.bf16.msra.mxu0 0
    %377 = vmatprep.subr.bf16.mxu0 0
    %378 = vmatpush1.bf16.msra.mxu0 0
    %379 = vmatprep.subr.bf16.mxu0 0
    %380 = vmatpush1.bf16.msra.mxu0 %v363
    %381 = vmatprep.subr.bf16.mxu0 0
    %382 = vmatpush2.bf16.msra.mxu0 0
    %383 = vmatprep.subr.bf16.mxu0 0
    %384 = vmatpush2.bf16.msra.mxu0 0
    %385 = vmatprep.subr.bf16.mxu0 0
    %386 = vmatpush2.bf16.msra.mxu0 0
    %387 = vmatprep.subr.bf16.mxu0 0
    %388 = vmatpush2.bf16.msra.mxu0 0
    %389 = vmatprep.subr.bf16.mxu0 0
    %390 = vmatpush2.bf16.msra.mxu0 0
    %391 = vmatprep.subr.bf16.mxu0 0
    %392 = vmatpush2.bf16.msra.mxu0 0
    %393 = vmatprep.subr.bf16.mxu0 0
    %394 = vmatpush2.bf16.msra.mxu0 0
    %395 = vmatprep.subr.bf16.mxu0 0
    %396 = vmatpush2.bf16.msra.mxu0 0
    %397 = vmatprep.mubr.bf16.mxu0 0
    %398 = vmatmul.mubr.bf16.gmra.mxu0 %v359
    %v399 = vpop.f32.mrf.mxu0
    %v400 = vadd.f32 0.0, %v399
    %v401 = vpop.f32.mrf.mxu0
    %v402 = vpop.f32.mrf.mxu0
    %v403 = vpop.f32.mrf.mxu0
    %404 = vdwg.mxu0
    %405 = vrot.lane.b32.xlu0 %v217, 64
    %v406 = vpop.permute.xlu0 %405
    %v408 = vsel %vm331, %v355, 0
    %v411 = vsel %vm361, %v406, 0
    %413 = vmatprep.subr.bf16.mxu0 0
    %414 = vmatpush1.bf16.msra.mxu0 0
    %415 = vmatprep.subr.bf16.mxu0 0
    %416 = vmatpush1.bf16.msra.mxu0 0
    %417 = vmatprep.subr.bf16.mxu0 0
    %418 = vmatpush1.bf16.msra.mxu0 0
    %419 = vmatprep.subr.bf16.mxu0 0
    %420 = vmatpush1.bf16.msra.mxu0 0
    %421 = vmatprep.subr.bf16.mxu0 0
    %422 = vmatpush1.bf16.msra.mxu0 0
    %423 = vmatprep.subr.bf16.mxu0 0
    %424 = vmatpush1.bf16.msra.mxu0 0
    %425 = vmatprep.subr.bf16.mxu0 0
    %426 = vmatpush1.bf16.msra.mxu0 0
    %427 = vmatprep.subr.bf16.mxu0 0
    %428 = vmatpush1.bf16.msra.mxu0 %v411
    %429 = vmatprep.subr.bf16.mxu0 0
    %430 = vmatpush2.bf16.msra.mxu0 0
    %431 = vmatprep.subr.bf16.mxu0 0
    %432 = vmatpush2.bf16.msra.mxu0 0
    %433 = vmatprep.subr.bf16.mxu0 0
    %434 = vmatpush2.bf16.msra.mxu0 0
    %435 = vmatprep.subr.bf16.mxu0 0
    %436 = vmatpush2.bf16.msra.mxu0 0
    %437 = vmatprep.subr.bf16.mxu0 0
    %438 = vmatpush2.bf16.msra.mxu0 0
    %439 = vmatprep.subr.bf16.mxu0 0
    %440 = vmatpush2.bf16.msra.mxu0 0
    %441 = vmatprep.subr.bf16.mxu0 0
    %442 = vmatpush2.bf16.msra.mxu0 0
    %443 = vmatprep.subr.bf16.mxu0 0
    %444 = vmatpush2.bf16.msra.mxu0 0
    %445 = vmatprep.mubr.bf16.mxu0 0
    %446 = vmatmul.mubr.bf16.gmra.mxu0 %v408
    %v447 = vpop.f32.mrf.mxu0
    %v448 = vadd.f32 0.0, %v447
    %v449 = vpop.f32.mrf.mxu0
    %v450 = vpop.f32.mrf.mxu0
    %v451 = vpop.f32.mrf.mxu0
    %452 = vdwg.mxu0
    %453 = vrot.lane.b32.xlu0 %v216, 112
    %v454 = vpop.permute.xlu0 %453
    %455 = vrot.lane.b32.xlu0 %v216, 80
    %v456 = vpop.permute.xlu0 %455
    %v458 = vsel %vm221, %v454, 0
    %v461 = vsel %vm221, %v456, 0
    %463 = vmatprep.subr.bf16.mxu0 0
    %464 = vmatpush1.bf16.xpose.msra.mxu0 0
    %465 = vmatprep.subr.bf16.mxu0 0
    %466 = vmatpush1.bf16.xpose.msra.mxu0 0
    %467 = vmatprep.subr.bf16.mxu0 0
    %468 = vmatpush1.bf16.xpose.msra.mxu0 0
    %469 = vmatprep.subr.bf16.mxu0 0
    %470 = vmatpush1.bf16.xpose.msra.mxu0 0
    %471 = vmatprep.subr.bf16.mxu0 0
    %472 = vmatpush1.bf16.xpose.msra.mxu0 0
    %473 = vmatprep.subr.bf16.mxu0 0
    %474 = vmatpush1.bf16.xpose.msra.mxu0 0
    %475 = vmatprep.subr.bf16.mxu0 0
    %476 = vmatpush1.bf16.xpose.msra.mxu0 0
    %477 = vmatprep.subr.bf16.mxu0 0
    %478 = vmatpush1.bf16.xpose.msra.mxu0 %v461
    %479 = vmatprep.subr.bf16.mxu0 0
    %480 = vmatpush2.bf16.xpose.msra.mxu0 0
    %481 = vmatprep.subr.bf16.mxu0 0
    %482 = vmatpush2.bf16.xpose.msra.mxu0 0
    %483 = vmatprep.subr.bf16.mxu0 0
    %484 = vmatpush2.bf16.xpose.msra.mxu0 0
    %485 = vmatprep.subr.bf16.mxu0 0
    %486 = vmatpush2.bf16.xpose.msra.mxu0 0
    %487 = vmatprep.subr.bf16.mxu0 0
    %488 = vmatpush2.bf16.xpose.msra.mxu0 0
    %489 = vmatprep.subr.bf16.mxu0 0
    %490 = vmatpush2.bf16.xpose.msra.mxu0 0
    %491 = vmatprep.subr.bf16.mxu0 0
    %492 = vmatpush2.bf16.xpose.msra.mxu0 0
    %493 = vmatprep.subr.bf16.mxu0 0
    %494 = vmatpush2.bf16.xpose.msra.mxu0 0
    %495 = vmatprep.mubr.bf16.mxu0 0
    %496 = vmatmul.mubr.bf16.gmra.mxu0 %v458
    %v497 = vpop.f32.mrf.mxu0
    %v498 = vadd.f32 0.0, %v497
    %v499 = vpop.f32.mrf.mxu0
    %v500 = vpop.f32.mrf.mxu0
    %v501 = vpop.f32.mrf.mxu0
    %502 = vdwg.mxu0
    %503 = vrot.lane.b32.xlu0 %v217, 112
    %v504 = vpop.permute.xlu0 %503
    %505 = vrot.lane.b32.xlu0 %v217, 80
    %v506 = vpop.permute.xlu0 %505
    %v508 = vsel %vm221, %v504, 0
    %v511 = vsel %vm221, %v506, 0
    %513 = vmatprep.subr.bf16.mxu0 0
    %514 = vmatpush1.bf16.xpose.msra.mxu0 0
    %515 = vmatprep.subr.bf16.mxu0 0
    %516 = vmatpush1.bf16.xpose.msra.mxu0 0
    %517 = vmatprep.subr.bf16.mxu0 0
    %518 = vmatpush1.bf16.xpose.msra.mxu0 0
    %519 = vmatprep.subr.bf16.mxu0 0
    %520 = vmatpush1.bf16.xpose.msra.mxu0 0
    %521 = vmatprep.subr.bf16.mxu0 0
    %522 = vmatpush1.bf16.xpose.msra.mxu0 0
    %523 = vmatprep.subr.bf16.mxu0 0
    %524 = vmatpush1.bf16.xpose.msra.mxu0 0
    %525 = vmatprep.subr.bf16.mxu0 0
    %526 = vmatpush1.bf16.xpose.msra.mxu0 0
    %527 = vmatprep.subr.bf16.mxu0 0
    %528 = vmatpush1.bf16.xpose.msra.mxu0 %v511
    %529 = vmatprep.subr.bf16.mxu0 0
    %530 = vmatpush2.bf16.xpose.msra.mxu0 0
    %531 = vmatprep.subr.bf16.mxu0 0
    %532 = vmatpush2.bf16.xpose.msra.mxu0 0
    %533 = vmatprep.subr.bf16.mxu0 0
    %534 = vmatpush2.bf16.xpose.msra.mxu0 0
    %535 = vmatprep.subr.bf16.mxu0 0
    %536 = vmatpush2.bf16.xpose.msra.mxu0 0
    %537 = vmatprep.subr.bf16.mxu0 0
    %538 = vmatpush2.bf16.xpose.msra.mxu0 0
    %539 = vmatprep.subr.bf16.mxu0 0
    %540 = vmatpush2.bf16.xpose.msra.mxu0 0
    %541 = vmatprep.subr.bf16.mxu0 0
    %542 = vmatpush2.bf16.xpose.msra.mxu0 0
    %543 = vmatprep.subr.bf16.mxu0 0
    %544 = vmatpush2.bf16.xpose.msra.mxu0 0
    %545 = vmatprep.mubr.bf16.mxu0 0
    %546 = vmatmul.mubr.bf16.gmra.mxu0 %v508
    %v547 = vpop.f32.mrf.mxu0
    %v548 = vadd.f32 0.0, %v547
    %v549 = vpop.f32.mrf.mxu0
    %v550 = vpop.f32.mrf.mxu0
    %v551 = vpop.f32.mrf.mxu0
    %552 = vdwg.mxu0
    %v553 = vmul.f32 %v498, 0.25
    %v554 = vmul.f32 %v548, 0.25
    %v555 = vadd.f32 %v553, %v322
    %v556 = vadd.f32 %v554, %v326
    %v557 = vsel %vm331, %v555, -inf
    %558 = vmax.xlane.f32.xlu0 %v557
    %v559 = vpop.xlane.xlu0 %558
    %v560 = vsel %vm331, %v556, -inf
    %561 = vmax.xlane.f32.xlu0 %v560
    %v562 = vpop.xlane.xlu0 %561
    %v563 = vsub.f32 %v555, %v559
    %v564 = vsub.f32 %v556, %v562
    %v565 = vmul.f32 %v563, 1.442695
    %v566 = vpow.pop %v565
    %v567 = vmul.f32 %v564, 1.442695
    %v568 = vpow.pop %v567
    %v569 = vsel %vm331, %v566, 0.0
    %570 = vadd.xlane.f32.xlu0 %v569
    %v571 = vpop.xlane.xlu0 %570
    %v572 = vsel %vm331, %v568, 0.0
    %573 = vadd.xlane.f32.xlu0 %v572
    %v574 = vpop.xlane.xlu0 %573
    %v575 = vrcp.pop %v571
    %v576 = vrcp.pop %v574
    %v577 = vmul.f32 %v566, %v575
    %v578 = vmul.f32 %v568, %v576
    %v579 = vpack.c.bf16 %v577, %v577
    %v580 = vpack.c.bf16 %v578, %v578
    %581 = vrot.lane.b32.xlu0 %v216, 48
    %v582 = vpop.permute.xlu0 %581
    %v584 = vsel %vm331, %v579, 0
    %v587 = vsel %vm361, %v582, 0
    %589 = vmatprep.subr.bf16.mxu0 0
    %590 = vmatpush1.bf16.msra.mxu0 0
    %591 = vmatprep.subr.bf16.mxu0 0
    %592 = vmatpush1.bf16.msra.mxu0 0
    %593 = vmatprep.subr.bf16.mxu0 0
    %594 = vmatpush1.bf16.msra.mxu0 0
    %595 = vmatprep.subr.bf16.mxu0 0
    %596 = vmatpush1.bf16.msra.mxu0 0
    %597 = vmatprep.subr.bf16.mxu0 0
    %598 = vmatpush1.bf16.msra.mxu0 0
    %599 = vmatprep.subr.bf16.mxu0 0
    %600 = vmatpush1.bf16.msra.mxu0 0
    %601 = vmatprep.subr.bf16.mxu0 0
    %602 = vmatpush1.bf16.msra.mxu0 0
    %603 = vmatprep.subr.bf16.mxu0 0
    %604 = vmatpush1.bf16.msra.mxu0 %v587
    %605 = vmatprep.subr.bf16.mxu0 0
    %606 = vmatpush2.bf16.msra.mxu0 0
    %607 = vmatprep.subr.bf16.mxu0 0
    %608 = vmatpush2.bf16.msra.mxu0 0
    %609 = vmatprep.subr.bf16.mxu0 0
    %610 = vmatpush2.bf16.msra.mxu0 0
    %611 = vmatprep.subr.bf16.mxu0 0
    %612 = vmatpush2.bf16.msra.mxu0 0
    %613 = vmatprep.subr.bf16.mxu0 0
    %614 = vmatpush2.bf16.msra.mxu0 0
    %615 = vmatprep.subr.bf16.mxu0 0
    %616 = vmatpush2.bf16.msra.mxu0 0
    %617 = vmatprep.subr.bf16.mxu0 0
    %618 = vmatpush2.bf16.msra.mxu0 0
    %619 = vmatprep.subr.bf16.mxu0 0
    %620 = vmatpush2.bf16.msra.mxu0 0
    %621 = vmatprep.mubr.bf16.mxu0 0
    %622 = vmatmul.mubr.bf16.gmra.mxu0 %v584
    %v623 = vpop.f32.mrf.mxu0
    %v624 = vadd.f32 0.0, %v623
    %v625 = vpop.f32.mrf.mxu0
    %v626 = vpop.f32.mrf.mxu0
    %v627 = vpop.f32.mrf.mxu0
    %628 = vdwg.mxu0
    %629 = vrot.lane.b32.xlu0 %v217, 48
    %v630 = vpop.permute.xlu0 %629
    %v632 = vsel %vm331, %v580, 0
    %v635 = vsel %vm361, %v630, 0
    %637 = vmatprep.subr.bf16.mxu0 0
    %638 = vmatpush1.bf16.msra.mxu0 0
    %639 = vmatprep.subr.bf16.mxu0 0
    %640 = vmatpush1.bf16.msra.mxu0 0
    %641 = vmatprep.subr.bf16.mxu0 0
    %642 = vmatpush1.bf16.msra.mxu0 0
    %643 = vmatprep.subr.bf16.mxu0 0
    %644 = vmatpush1.bf16.msra.mxu0 0
    %645 = vmatprep.subr.bf16.mxu0 0
    %646 = vmatpush1.bf16.msra.mxu0 0
    %647 = vmatprep.subr.bf16.mxu0 0
    %648 = vmatpush1.bf16.msra.mxu0 0
    %649 = vmatprep.subr.bf16.mxu0 0
    %650 = vmatpush1.bf16.msra.mxu0 0
    %651 = vmatprep.subr.bf16.mxu0 0
    %652 = vmatpush1.bf16.msra.mxu0 %v635
    %653 = vmatprep.subr.bf16.mxu0 0
    %654 = vmatpush2.bf16.msra.mxu0 0
    %655 = vmatprep.subr.bf16.mxu0 0
    %656 = vmatpush2.bf16.msra.mxu0 0
    %657 = vmatprep.subr.bf16.mxu0 0
    %658 = vmatpush2.bf16.msra.mxu0 0
    %659 = vmatprep.subr.bf16.mxu0 0
    %660 = vmatpush2.bf16.msra.mxu0 0
    %661 = vmatprep.subr.bf16.mxu0 0
    %662 = vmatpush2.bf16.msra.mxu0 0
    %663 = vmatprep.subr.bf16.mxu0 0
    %664 = vmatpush2.bf16.msra.mxu0 0
    %665 = vmatprep.subr.bf16.mxu0 0
    %666 = vmatpush2.bf16.msra.mxu0 0
    %667 = vmatprep.subr.bf16.mxu0 0
    %668 = vmatpush2.bf16.msra.mxu0 0
    %669 = vmatprep.mubr.bf16.mxu0 0
    %670 = vmatmul.mubr.bf16.gmra.mxu0 %v632
    %v671 = vpop.f32.mrf.mxu0
    %v672 = vadd.f32 0.0, %v671
    %v673 = vpop.f32.mrf.mxu0
    %v674 = vpop.f32.mrf.mxu0
    %v675 = vpop.f32.mrf.mxu0
    %676 = vdwg.mxu0
    %679 = vrot.lane.b32.xlu0 %v624, 16
    %v680 = vpop.permute.xlu0 %679
    %681 = vrot.lane.b32.xlu0 %v672, 16
    %v682 = vpop.permute.xlu0 %681
    %v685 = vsel %vm221, %v400, %v680
    %v686 = vsel %vm221, %v448, %v682
    %v687 = vld [vmem:[%s7] sm:$0xf]
    %v688 = vld [vmem:[%s7 + $0x4] sm:$0xf]
    %v689 = vld [vmem:[%s7 + $0x8] sm:$0xf]
    %v690 = vld [vmem:[%s7 + $0xc] sm:$0xf]
    %v691 = vpack.c.bf16 %v686, %v685
    %v692 = vld [vmem:[%s8] sm:$0x1]
    %v694 = vlaneseq
    %v695 = vshrl.u32 %v694, 7
    %v696 = vsub.s32 0, %v695
    %v697 = vrot.slane %v692, %v696
    %v703 = vunpack.c.l.b16 %v687
    %v704 = vunpack.c.l.b16 %v688
    %v705 = vunpack.c.l.b16 %v689
    %v706 = vunpack.c.l.b16 %v690
    %v707 = vpack.c.b16 %v704, %v703
    %v708 = vpack.c.b16 %v706, %v705
    %v712 = vsel %vm78, %v691, 0
    %714 = vmatprep.subr.bf16.mxu0 0
    %715 = vmatpush1.bf16.msra.mxu0 0
    %716 = vmatprep.subr.bf16.mxu0 0
    %717 = vmatpush1.bf16.msra.mxu0 0
    %718 = vmatprep.subr.bf16.mxu0 0
    %719 = vmatpush1.bf16.msra.mxu0 0
    %720 = vmatprep.subr.bf16.mxu0 0
    %721 = vmatpush1.bf16.msra.mxu0 0
    %722 = vmatprep.subr.bf16.mxu0 0
    %723 = vmatpush1.bf16.msra.mxu0 0
    %724 = vmatprep.subr.bf16.mxu0 0
    %725 = vmatpush1.bf16.msra.mxu0 0
    %726 = vmatprep.subr.bf16.mxu0 0
    %727 = vmatpush1.bf16.msra.mxu0 %v708
    %728 = vmatprep.subr.bf16.mxu0 0
    %729 = vmatpush1.bf16.msra.mxu0 %v707
    %730 = vmatprep.subr.bf16.mxu0 0
    %731 = vmatpush2.bf16.msra.mxu0 0
    %732 = vmatprep.subr.bf16.mxu0 0
    %733 = vmatpush2.bf16.msra.mxu0 0
    %734 = vmatprep.subr.bf16.mxu0 0
    %735 = vmatpush2.bf16.msra.mxu0 0
    %736 = vmatprep.subr.bf16.mxu0 0
    %737 = vmatpush2.bf16.msra.mxu0 0
    %738 = vmatprep.subr.bf16.mxu0 0
    %739 = vmatpush2.bf16.msra.mxu0 0
    %740 = vmatprep.subr.bf16.mxu0 0
    %741 = vmatpush2.bf16.msra.mxu0 0
    %742 = vmatprep.subr.bf16.mxu0 0
    %743 = vmatpush2.bf16.msra.mxu0 0
    %744 = vmatprep.subr.bf16.mxu0 0
    %745 = vmatpush2.bf16.msra.mxu0 0
    %746 = vmatprep.mubr.bf16.mxu0 0
    %747 = vmatmul.mubr.bf16.gmra.mxu0 %v712
    %v748 = vpop.f32.mrf.mxu0
    %v749 = vadd.f32 %v697, %v748
    %v750 = vpop.f32.mrf.mxu0
    %v751 = vpop.f32.mrf.mxu0
    %v752 = vadd.f32 %v697, %v751
    %v753 = vpop.f32.mrf.mxu0
    %754 = vdwg.mxu0
    %v755 = vadd.f32 %v749, %v120
    %v756 = vadd.f32 %v752, %v121
    %v757 = vld [vmem:[%s9] sm:$0x1]
    %v758 = vld [vmem:[%s10] sm:$0x1]
    %v759 = vsel %vm78, %v755, 0.0
    %760 = vadd.xlane.f32.xlu0 %v759
    %v761 = vpop.xlane.xlu0 %760
    %v762 = vsel %vm78, %v756, 0.0
    %763 = vadd.xlane.f32.xlu0 %v762
    %v764 = vpop.xlane.xlu0 %763
    %v765 = vmul.f32 %v761, %v85
    %v766 = vmul.f32 %v764, %v85
    %v767 = vsub.f32 %v755, %v765
    %v768 = vsub.f32 %v756, %v766
    %v769 = vmul.f32 %v767, %v767
    %v770 = vmul.f32 %v768, %v768
    %v771 = vsel %vm78, %v769, 0.0
    %772 = vadd.xlane.f32.xlu0 %v771
    %v773 = vpop.xlane.xlu0 %772
    %v774 = vsel %vm78, %v770, 0.0
    %775 = vadd.xlane.f32.xlu0 %v774
    %v776 = vpop.xlane.xlu0 %775
    %v777 = vmul.f32 %v773, %v85
    %v778 = vmul.f32 %v776, %v85
    %v779 = vadd.f32 %v777, 1e-12
    %v780 = vadd.f32 %v778, 1e-12
    %v781 = vrsqrt.pop %v779
    %v782 = vrsqrt.pop %v780
    %v783 = vmul.f32 %v767, %v781
    %v784 = vmul.f32 %v768, %v782
    %v786 = vlaneseq
    %v787 = vshrl.u32 %v786, 7
    %v788 = vsub.s32 0, %v787
    %v789 = vrot.slane %v757, %v788
    %v791 = vmul.f32 %v783, %v789
    %v792 = vmul.f32 %v784, %v789
    %v794 = vlaneseq
    %v795 = vshrl.u32 %v794, 7
    %v796 = vsub.s32 0, %v795
    %v797 = vrot.slane %v758, %v796
    %v799 = vadd.f32 %v791, %v797
    %v800 = vadd.f32 %v792, %v797
    %v801 = vld [vmem:[%s11] sm:$0xf]
    %v802 = vld [vmem:[%s11 + $0x4] sm:$0xf]
    %v803 = vld [vmem:[%s11 + $0x8] sm:$0xf]
    %v804 = vld [vmem:[%s11 + $0xc] sm:$0xf]
    %v805 = vpack.c.bf16 %v800, %v799
    %v806 = vld [vmem:[%s12] sm:$0x1]
    %v808 = vlaneseq
    %v809 = vshrl.u32 %v808, 7
    %v810 = vsub.s32 0, %v809
    %v811 = vrot.slane %v806, %v810
    %v817 = vunpack.c.l.b16 %v801
    %v818 = vunpack.c.l.b16 %v802
    %v819 = vunpack.c.l.b16 %v803
    %v820 = vunpack.c.l.b16 %v804
    %v821 = vpack.c.b16 %v818, %v817
    %v822 = vpack.c.b16 %v820, %v819
    %v826 = vsel %vm78, %v805, 0
    %828 = vmatprep.subr.bf16.mxu0 0
    %829 = vmatpush1.bf16.msra.mxu0 0
    %830 = vmatprep.subr.bf16.mxu0 0
    %831 = vmatpush1.bf16.msra.mxu0 0
    %832 = vmatprep.subr.bf16.mxu0 0
    %833 = vmatpush1.bf16.msra.mxu0 0
    %834 = vmatprep.subr.bf16.mxu0 0
    %835 = vmatpush1.bf16.msra.mxu0 0
    %836 = vmatprep.subr.bf16.mxu0 0
    %837 = vmatpush1.bf16.msra.mxu0 0
    %838 = vmatprep.subr.bf16.mxu0 0
    %839 = vmatpush1.bf16.msra.mxu0 0
    %840 = vmatprep.subr.bf16.mxu0 0
    %841 = vmatpush1.bf16.msra.mxu0 %v822
    %842 = vmatprep.subr.bf16.mxu0 0
    %843 = vmatpush1.bf16.msra.mxu0 %v821
    %844 = vmatprep.subr.bf16.mxu0 0
    %845 = vmatpush2.bf16.msra.mxu0 0
    %846 = vmatprep.subr.bf16.mxu0 0
    %847 = vmatpush2.bf16.msra.mxu0 0
    %848 = vmatprep.subr.bf16.mxu0 0
    %849 = vmatpush2.bf16.msra.mxu0 0
    %850 = vmatprep.subr.bf16.mxu0 0
    %851 = vmatpush2.bf16.msra.mxu0 0
    %852 = vmatprep.subr.bf16.mxu0 0
    %853 = vmatpush2.bf16.msra.mxu0 0
    %854 = vmatprep.subr.bf16.mxu0 0
    %855 = vmatpush2.bf16.msra.mxu0 0
    %856 = vmatprep.subr.bf16.mxu0 0
    %857 = vmatpush2.bf16.msra.mxu0 0
    %858 = vmatprep.subr.bf16.mxu0 0
    %859 = vmatpush2.bf16.msra.mxu0 0
    %860 = vmatprep.mubr.bf16.mxu0 0
    %861 = vmatmul.mubr.bf16.gmra.mxu0 %v826
    %v862 = vpop.f32.mrf.mxu0
    %v863 = vadd.f32 %v811, %v862
    %v864 = vpop.f32.mrf.mxu0
    %v865 = vpop.f32.mrf.mxu0
    %v866 = vadd.f32 %v811, %v865
    %v867 = vpop.f32.mrf.mxu0
    %868 = vdwg.mxu0
    %v869 = vmul.f32 %v863, 0.5
    %v870 = vmul.f32 %v866, 0.5
    %v871 = vmul.f32 %v863, 0.044715
    %v872 = vmul.f32 %v866, 0.044715
    %v873 = vmul.f32 %v871, %v863
    %v874 = vmul.f32 %v872, %v866
    %v875 = vmul.f32 %v873, %v863
    %v876 = vmul.f32 %v874, %v866
    %v877 = vadd.f32 %v863, %v875
    %v878 = vadd.f32 %v866, %v876
    %v879 = vmul.f32 %v877, 0.7978846
    %v880 = vmul.f32 %v878, 0.7978846
    %v881 = vtanh.pop %v879
    %v882 = vtanh.pop %v880
    %v883 = vadd.f32 %v881, 1.0
    %v884 = vadd.f32 %v882, 1.0
    %v885 = vmul.f32 %v869, %v883
    %v886 = vmul.f32 %v870, %v884
    %v887 = vld [vmem:[%s13] sm:$0xf]
    %v888 = vld [vmem:[%s13 + $0x4] sm:$0xf]
    %v889 = vld [vmem:[%s13 + $0x8] sm:$0xf]
    %v890 = vld [vmem:[%s13 + $0xc] sm:$0xf]
    %v891 = vld [vmem:[%s13 + $0x10] sm:$0xf]
    %v892 = vld [vmem:[%s13 + $0x14] sm:$0xf]
    %v893 = vld [vmem:[%s13 + $0x18] sm:$0xf]
    %v894 = vld [vmem:[%s13 + $0x1c] sm:$0xf]
    %v895 = vpack.c.bf16 %v886, %v885
    %v896 = vld [vmem:[%s14] sm:$0x1]
    %v898 = vlaneseq
    %v899 = vshrl.u32 %v898, 7
    %v900 = vsub.s32 0, %v899
    %v901 = vrot.slane %v896, %v900
    %v911 = vunpack.c.l.b16 %v887
    %v912 = vunpack.c.l.b16 %v888
    %v913 = vunpack.c.l.b16 %v889
    %v914 = vunpack.c.l.b16 %v890
    %v915 = vunpack.c.l.b16 %v891
    %v916 = vunpack.c.l.b16 %v892
    %v917 = vunpack.c.l.b16 %v893
    %v918 = vunpack.c.l.b16 %v894
    %v919 = vpack.c.b16 %v912, %v911
    %v920 = vpack.c.b16 %v914, %v913
    %v921 = vpack.c.b16 %v916, %v915
    %v922 = vpack.c.b16 %v918, %v917
    %vm927 = vcmask 523264
    %v929 = vsel %vm927, %v895, 0
    %931 = vmatprep.subr.bf16.mxu0 0
    %932 = vmatpush1.bf16.msra.mxu0 0
    %933 = vmatprep.subr.bf16.mxu0 0
    %934 = vmatpush1.bf16.msra.mxu0 0
    %935 = vmatprep.subr.bf16.mxu0 0
    %936 = vmatpush1.bf16.msra.mxu0 0
    %937 = vmatprep.subr.bf16.mxu0 0
    %938 = vmatpush1.bf16.msra.mxu0 0
    %939 = vmatprep.subr.bf16.mxu0 0
    %940 = vmatpush1.bf16.msra.mxu0 %v922
    %941 = vmatprep.subr.bf16.mxu0 0
    %942 = vmatpush1.bf16.msra.mxu0 %v921
    %943 = vmatprep.subr.bf16.mxu0 0
    %944 = vmatpush1.bf16.msra.mxu0 %v920
    %945 = vmatprep.subr.bf16.mxu0 0
    %946 = vmatpush1.bf16.msra.mxu0 %v919
    %947 = vmatprep.subr.bf16.mxu0 0
    %948 = vmatpush2.bf16.msra.mxu0 0
    %949 = vmatprep.subr.bf16.mxu0 0
    %950 = vmatpush2.bf16.msra.mxu0 0
    %951 = vmatprep.subr.bf16.mxu0 0
    %952 = vmatpush2.bf16.msra.mxu0 0
    %953 = vmatprep.subr.bf16.mxu0 0
    %954 = vmatpush2.bf16.msra.mxu0 0
    %955 = vmatprep.subr.bf16.mxu0 0
    %956 = vmatpush2.bf16.msra.mxu0 0
    %957 = vmatprep.subr.bf16.mxu0 0
    %958 = vmatpush2.bf16.msra.mxu0 0
    %959 = vmatprep.subr.bf16.mxu0 0
    %960 = vmatpush2.bf16.msra.mxu0 0
    %961 = vmatprep.subr.bf16.mxu0 0
    %962 = vmatpush2.bf16.msra.mxu0 0
    %963 = vmatprep.mubr.bf16.mxu0 0
    %964 = vmatmul.mubr.bf16.gmra.mxu0 %v929
    %v965 = vpop.f32.mrf.mxu0
    %v966 = vadd.f32 %v901, %v965
    %v967 = vpop.f32.mrf.mxu0
    %v968 = vpop.f32.mrf.mxu0
    %v969 = vadd.f32 %v901, %v968
    %v970 = vpop.f32.mrf.mxu0
    %971 = vdwg.mxu0
    %v972 = vadd.f32 %v966, %v799
    %v973 = vadd.f32 %v969, %v800
    %v974 = vld [vmem:[%s15] sm:$0x1]
    %v975 = vld [vmem:[%s16] sm:$0x1]
    %v976 = vsel %vm78, %v972, 0.0
    %977 = vadd.xlane.f32.xlu0 %v976
    %v978 = vpop.xlane.xlu0 %977
    %v979 = vsel %vm78, %v973, 0.0
    %980 = vadd.xlane.f32.xlu0 %v979
    %v981 = vpop.xlane.xlu0 %980
    %v982 = vmul.f32 %v978, %v85
    %v983 = vmul.f32 %v981, %v85
    %v984 = vsub.f32 %v972, %v982
    %v985 = vsub.f32 %v973, %v983
    %v986 = vmul.f32 %v984, %v984
    %v987 = vmul.f32 %v985, %v985
    %v988 = vsel %vm78, %v986, 0.0
    %989 = vadd.xlane.f32.xlu0 %v988
    %v990 = vpop.xlane.xlu0 %989
    %v991 = vsel %vm78, %v987, 0.0
    %992 = vadd.xlane.f32.xlu0 %v991
    %v993 = vpop.xlane.xlu0 %992
    %v994 = vmul.f32 %v990, %v85
    %v995 = vmul.f32 %v993, %v85
    %v996 = vadd.f32 %v994, 1e-12
    %v997 = vadd.f32 %v995, 1e-12
    %v998 = vrsqrt.pop %v996
    %v999 = vrsqrt.pop %v997
    %v1000 = vmul.f32 %v984, %v998
    %v1001 = vmul.f32 %v985, %v999
    %v1003 = vlaneseq
    %v1004 = vshrl.u32 %v1003, 7
    %v1005 = vsub.s32 0, %v1004
    %v1006 = vrot.slane %v974, %v1005
    %v1008 = vmul.f32 %v1000, %v1006
    %v1009 = vmul.f32 %v1001, %v1006
    %v1011 = vlaneseq
    %v1012 = vshrl.u32 %v1011, 7
    %v1013 = vsub.s32 0, %v1012
    %v1014 = vrot.slane %v975, %v1013
    %v1016 = vadd.f32 %v1008, %v1014
    %v1017 = vadd.f32 %v1009, %v1014
    %s1018 = scalar_lea.vmem %s5, 16
    %v1019 = vld [vmem:[%s1018] sm:$0xf]
    %v1020 = vld [vmem:[%s1018 + $0x4] sm:$0xf]
    %v1021 = vld [vmem:[%s1018 + $0x8] sm:$0xf]
    %v1022 = vld [vmem:[%s1018 + $0xc] sm:$0xf]
    %v1023 = vpack.c.bf16 %v1017, %v1016
    %s1024 = scalar_lea.vmem %s6, 1
    %v1025 = vld [vmem:[%s1024] sm:$0x1]
    %v1027 = vlaneseq
    %v1028 = vshrl.u32 %v1027, 7
    %v1029 = vsub.s32 0, %v1028
    %v1030 = vrot.slane %v1025, %v1029
    %v1036 = vunpack.c.l.b16 %v1019
    %v1037 = vunpack.c.l.b16 %v1020
    %v1038 = vunpack.c.l.b16 %v1021
    %v1039 = vunpack.c.l.b16 %v1022
    %v1040 = vpack.c.b16 %v1037, %v1036
    %v1041 = vpack.c.b16 %v1039, %v1038
    %v1045 = vsel %vm78, %v1023, 0
    %1047 = vmatprep.subr.bf16.mxu0 0
    %1048 = vmatpush1.bf16.msra.mxu0 0
    %1049 = vmatprep.subr.bf16.mxu0 0
    %1050 = vmatpush1.bf16.msra.mxu0 0
    %1051 = vmatprep.subr.bf16.mxu0 0
    %1052 = vmatpush1.bf16.msra.mxu0 0
    %1053 = vmatprep.subr.bf16.mxu0 0
    %1054 = vmatpush1.bf16.msra.mxu0 0
    %1055 = vmatprep.subr.bf16.mxu0 0
    %1056 = vmatpush1.bf16.msra.mxu0 0
    %1057 = vmatprep.subr.bf16.mxu0 0
    %1058 = vmatpush1.bf16.msra.mxu0 0
    %1059 = vmatprep.subr.bf16.mxu0 0
    %1060 = vmatpush1.bf16.msra.mxu0 %v1041
    %1061 = vmatprep.subr.bf16.mxu0 0
    %1062 = vmatpush1.bf16.msra.mxu0 %v1040
    %1063 = vmatprep.subr.bf16.mxu0 0
    %1064 = vmatpush2.bf16.msra.mxu0 0
    %1065 = vmatprep.subr.bf16.mxu0 0
    %1066 = vmatpush2.bf16.msra.mxu0 0
    %1067 = vmatprep.subr.bf16.mxu0 0
    %1068 = vmatpush2.bf16.msra.mxu0 0
    %1069 = vmatprep.subr.bf16.mxu0 0
    %1070 = vmatpush2.bf16.msra.mxu0 0
    %1071 = vmatprep.subr.bf16.mxu0 0
    %1072 = vmatpush2.bf16.msra.mxu0 0
    %1073 = vmatprep.subr.bf16.mxu0 0
    %1074 = vmatpush2.bf16.msra.mxu0 0
    %1075 = vmatprep.subr.bf16.mxu0 0
    %1076 = vmatpush2.bf16.msra.mxu0 0
    %1077 = vmatprep.subr.bf16.mxu0 0
    %1078 = vmatpush2.bf16.msra.mxu0 0
    %1079 = vmatprep.mubr.bf16.mxu0 0
    %1080 = vmatmul.mubr.bf16.gmra.mxu0 %v1045
    %v1081 = vpop.f32.mrf.mxu0
    %v1082 = vadd.f32 %v1030, %v1081
    %v1083 = vpop.f32.mrf.mxu0
    %v1084 = vpop.f32.mrf.mxu0
    %v1085 = vadd.f32 %v1030, %v1084
    %v1086 = vpop.f32.mrf.mxu0
    %1087 = vdwg.mxu0
    %v1088 = vpack.c.bf16 %v1082, %v1082
    %v1089 = vpack.c.bf16 %v1085, %v1085
    %1091 = vrot.lane.b32.xlu0 %v1088, 96
    %v1092 = vpop.permute.xlu0 %1091
    %v1094 = vsel %vm221, %v1088, 0
    %v1097 = vsel %vm221, %v1092, 0
    %1099 = vmatprep.subr.bf16.mxu0 0
    %1100 = vmatpush1.bf16.xpose.msra.mxu0 0
    %1101 = vmatprep.subr.bf16.mxu0 0
    %1102 = vmatpush1.bf16.xpose.msra.mxu0 0
    %1103 = vmatprep.subr.bf16.mxu0 0
    %1104 = vmatpush1.bf16.xpose.msra.mxu0 0
    %1105 = vmatprep.subr.bf16.mxu0 0
    %1106 = vmatpush1.bf16.xpose.msra.mxu0 0
    %1107 = vmatprep.subr.bf16.mxu0 0
    %1108 = vmatpush1.bf16.xpose.msra.mxu0 0
    %1109 = vmatprep.subr.bf16.mxu0 0
    %1110 = vmatpush1.bf16.xpose.msra.mxu0 0
    %1111 = vmatprep.subr.bf16.mxu0 0
    %1112 = vmatpush1.bf16.xpose.msra.mxu0 0
    %1113 = vmatprep.subr.bf16.mxu0 0
    %1114 = vmatpush1.bf16.xpose.msra.mxu0 %v1097
    %1115 = vmatprep.subr.bf16.mxu0 0
    %1116 = vmatpush2.bf16.xpose.msra.mxu0 0
    %1117 = vmatprep.subr.bf16.mxu0 0
    %1118 = vmatpush2.bf16.xpose.msra.mxu0 0
    %1119 = vmatprep.subr.bf16.mxu0 0
    %1120 = vmatpush2.bf16.xpose.msra.mxu0 0
    %1121 = vmatprep.subr.bf16.mxu0 0
    %1122 = vmatpush2.bf16.xpose.msra.mxu0 0
    %1123 = vmatprep.subr.bf16.mxu0 0
    %1124 = vmatpush2.bf16.xpose.msra.mxu0 0
    %1125 = vmatprep.subr.bf16.mxu0 0
    %1126 = vmatpush2.bf16.xpose.msra.mxu0 0
    %1127 = vmatprep.subr.bf16.mxu0 0
    %1128 = vmatpush2.bf16.xpose.msra.mxu0 0
    %1129 = vmatprep.subr.bf16.mxu0 0
    %1130 = vmatpush2.bf16.xpose.msra.mxu0 0
    %1131 = vmatprep.mubr.bf16.mxu0 0
    %1132 = vmatmul.mubr.bf16.gmra.mxu0 %v1094
    %v1133 = vpop.f32.mrf.mxu0
    %v1134 = vadd.f32 0.0, %v1133
    %v1135 = vpop.f32.mrf.mxu0
    %v1136 = vpop.f32.mrf.mxu0
    %v1137 = vpop.f32.mrf.mxu0
    %1138 = vdwg.mxu0
    %1140 = vrot.lane.b32.xlu0 %v1089, 96
    %v1141 = vpop.permute.xlu0 %1140
    %v1143 = vsel %vm221, %v1089, 0
    %v1146 = vsel %vm221, %v1141, 0
    %1148 = vmatprep.subr.bf16.mxu0 0
    %1149 = vmatpush1.bf16.xpose.msra.mxu0 0
    %1150 = vmatprep.subr.bf16.mxu0 0
    %1151 = vmatpush1.bf16.xpose.msra.mxu0 0
    %1152 = vmatprep.subr.bf16.mxu0 0
    %1153 = vmatpush1.bf16.xpose.msra.mxu0 0
    %1154 = vmatprep.subr.bf16.mxu0 0
    %1155 = vmatpush1.bf16.xpose.msra.mxu0 0
    %1156 = vmatprep.subr.bf16.mxu0 0
    %1157 = vmatpush1.bf16.xpose.msra.mxu0 0
    %1158 = vmatprep.subr.bf16.mxu0 0
    %1159 = vmatpush1.bf16.xpose.msra.mxu0 0
    %1160 = vmatprep.subr.bf16.mxu0 0
    %1161 = vmatpush1.bf16.xpose.msra.mxu0 0
    %1162 = vmatprep.subr.bf16.mxu0 0
    %1163 = vmatpush1.bf16.xpose.msra.mxu0 %v1146
    %1164 = vmatprep.subr.bf16.mxu0 0
    %1165 = vmatpush2.bf16.xpose.msra.mxu0 0
    %1166 = vmatprep.subr.bf16.mxu0 0
    %1167 = vmatpush2.bf16.xpose.msra.mxu0 0
    %1168 = vmatprep.subr.bf16.mxu0 0
    %1169 = vmatpush2.bf16.xpose.msra.mxu0 0
    %1170 = vmatprep.subr.bf16.mxu0 0
    %1171 = vmatpush2.bf16.xpose.msra.mxu0 0
    %1172 = vmatprep.subr.bf16.mxu0 0
    %1173 = vmatpush2.bf16.xpose.msra.mxu0 0
    %1174 = vmatprep.subr.bf16.mxu0 0
    %1175 = vmatpush2.bf16.xpose.msra.mxu0 0
    %1176 = vmatprep.subr.bf16.mxu0 0
    %1177 = vmatpush2.bf16.xpose.msra.mxu0 0
    %1178 = vmatprep.subr.bf16.mxu0 0
    %1179 = vmatpush2.bf16.xpose.msra.mxu0 0
    %1180 = vmatprep.mubr.bf16.mxu0 0
    %1181 = vmatmul.mubr.bf16.gmra.mxu0 %v1143
    %v1182 = vpop.f32.mrf.mxu0
    %v1183 = vadd.f32 0.0, %v1182
    %v1184 = vpop.f32.mrf.mxu0
    %v1185 = vpop.f32.mrf.mxu0
    %v1186 = vpop.f32.mrf.mxu0
    %1187 = vdwg.mxu0
    %v1188 = vmul.f32 %v1134, 0.25
    %v1189 = vmul.f32 %v1183, 0.25
    %v1190 = vadd.f32 %v1188, %v322
    %v1191 = vadd.f32 %v1189, %v326
    %v1192 = vsel %vm331, %v1190, -inf
    %1193 = vmax.xlane.f32.xlu0 %v1192
    %v1194 = vpop.xlane.xlu0 %1193
    %v1195 = vsel %vm331, %v1191, -inf
    %1196 = vmax.xlane.f32.xlu0 %v1195
    %v1197 = vpop.xlane.xlu0 %1196
    %v1198 = vsub.f32 %v1190, %v1194
    %v1199 = vsub.f32 %v1191, %v1197
    %v1200 = vmul.f32 %v1198, 1.442695
    %v1201 = vpow.pop %v1200
    %v1202 = vmul.f32 %v1199, 1.442695
    %v1203 = vpow.pop %v1202
    %v1204 = vsel %vm331, %v1201, 0.0
    %1205 = vadd.xlane.f32.xlu0 %v1204
    %v1206 = vpop.xlane.xlu0 %1205
    %v1207 = vsel %vm331, %v1203, 0.0
    %1208 = vadd.xlane.f32.xlu0 %v1207
    %v1209 = vpop.xlane.xlu0 %1208
    %v1210 = vrcp.pop %v1206
    %v1211 = vrcp.pop %v1209
    %v1212 = vmul.f32 %v1201, %v1210
    %v1213 = vmul.f32 %v1203, %v1211
    %v1214 = vpack.c.bf16 %v1212, %v1212
    %v1215 = vpack.c.bf16 %v1213, %v1213
    %1216 = vrot.lane.b32.xlu0 %v1088, 64
    %v1217 = vpop.permute.xlu0 %1216
    %v1219 = vsel %vm331, %v1214, 0
    %v1222 = vsel %vm361, %v1217, 0
    %1224 = vmatprep.subr.bf16.mxu0 0
    %1225 = vmatpush1.bf16.msra.mxu0 0
    %1226 = vmatprep.subr.bf16.mxu0 0
    %1227 = vmatpush1.bf16.msra.mxu0 0
    %1228 = vmatprep.subr.bf16.mxu0 0
    %1229 = vmatpush1.bf16.msra.mxu0 0
    %1230 = vmatprep.subr.bf16.mxu0 0
    %1231 = vmatpush1.bf16.msra.mxu0 0
    %1232 = vmatprep.subr.bf16.mxu0 0
    %1233 = vmatpush1.bf16.msra.mxu0 0
    %1234 = vmatprep.subr.bf16.mxu0 0
    %1235 = vmatpush1.bf16.msra.mxu0 0
    %1236 = vmatprep.subr.bf16.mxu0 0
    %1237 = vmatpush1.bf16.msra.mxu0 0
    %1238 = vmatprep.subr.bf16.mxu0 0
    %1239 = vmatpush1.bf16.msra.mxu0 %v1222
    %1240 = vmatprep.subr.bf16.mxu0 0
    %1241 = vmatpush2.bf16.msra.mxu0 0
    %1242 = vmatprep.subr.bf16.mxu0 0
    %1243 = vmatpush2.bf16.msra.mxu0 0
    %1244 = vmatprep.subr.bf16.mxu0 0
    %1245 = vmatpush2.bf16.msra.mxu0 0
    %1246 = vmatprep.subr.bf16.mxu0 0
    %1247 = vmatpush2.bf16.msra.mxu0 0
    %1248 = vmatprep.subr.bf16.mxu0 0
    %1249 = vmatpush2.bf16.msra.mxu0 0
    %1250 = vmatprep.subr.bf16.mxu0 0
    %1251 = vmatpush2.bf16.msra.mxu0 0
    %1252 = vmatprep.subr.bf16.mxu0 0
    %1253 = vmatpush2.bf16.msra.mxu0 0
    %1254 = vmatprep.subr.bf16.mxu0 0
    %1255 = vmatpush2.bf16.msra.mxu0 0
    %1256 = vmatprep.mubr.bf16.mxu0 0
    %1257 = vmatmul.mubr.bf16.gmra.mxu0 %v1219
    %v1258 = vpop.f32.mrf.mxu0
    %v1259 = vadd.f32 0.0, %v1258
    %v1260 = vpop.f32.mrf.mxu0
    %v1261 = vpop.f32.mrf.mxu0
    %v1262 = vpop.f32.mrf.mxu0
    %1263 = vdwg.mxu0
    %1264 = vrot.lane.b32.xlu0 %v1089, 64
    %v1265 = vpop.permute.xlu0 %1264
    %v1267 = vsel %vm331, %v1215, 0
    %v1270 = vsel %vm361, %v1265, 0
    %1272 = vmatprep.subr.bf16.mxu0 0
    %1273 = vmatpush1.bf16.msra.mxu0 0
    %1274 = vmatprep.subr.bf16.mxu0 0
    %1275 = vmatpush1.bf16.msra.mxu0 0
    %1276 = vmatprep.subr.bf16.mxu0 0
    %1277 = vmatpush1.bf16.msra.mxu0 0
    %1278 = vmatprep.subr.bf16.mxu0 0
    %1279 = vmatpush1.bf16.msra.mxu0 0
    %1280 = vmatprep.subr.bf16.mxu0 0
    %1281 = vmatpush1.bf16.msra.mxu0 0
    %1282 = vmatprep.subr.bf16.mxu0 0
    %1283 = vmatpush1.bf16.msra.mxu0 0
    %1284 = vmatprep.subr.bf16.mxu0 0
    %1285 = vmatpush1.bf16.msra.mxu0 0
    %1286 = vmatprep.subr.bf16.mxu0 0
    %1287 = vmatpush1.bf16.msra.mxu0 %v1270
    %1288 = vmatprep.subr.bf16.mxu0 0
    %1289 = vmatpush2.bf16.msra.mxu0 0
    %1290 = vmatprep.subr.bf16.mxu0 0
    %1291 = vmatpush2.bf16.msra.mxu0 0
    %1292 = vmatprep.subr.bf16.mxu0 0
    %1293 = vmatpush2.bf16.msra.mxu0 0
    %1294 = vmatprep.subr.bf16.mxu0 0
    %1295 = vmatpush2.bf16.msra.mxu0 0
    %1296 = vmatprep.subr.bf16.mxu0 0
    %1297 = vmatpush2.bf16.msra.mxu0 0
    %1298 = vmatprep.subr.bf16.mxu0 0
    %1299 = vmatpush2.bf16.msra.mxu0 0
    %1300 = vmatprep.subr.bf16.mxu0 0
    %1301 = vmatpush2.bf16.msra.mxu0 0
    %1302 = vmatprep.subr.bf16.mxu0 0
    %1303 = vmatpush2.bf16.msra.mxu0 0
    %1304 = vmatprep.mubr.bf16.mxu0 0
    %1305 = vmatmul.mubr.bf16.gmra.mxu0 %v1267
    %v1306 = vpop.f32.mrf.mxu0
    %v1307 = vadd.f32 0.0, %v1306
    %v1308 = vpop.f32.mrf.mxu0
    %v1309 = vpop.f32.mrf.mxu0
    %v1310 = vpop.f32.mrf.mxu0
    %1311 = vdwg.mxu0
    %1312 = vrot.lane.b32.xlu0 %v1088, 112
    %v1313 = vpop.permute.xlu0 %1312
    %1314 = vrot.lane.b32.xlu0 %v1088, 80
    %v1315 = vpop.permute.xlu0 %1314
    %v1317 = vsel %vm221, %v1313, 0
    %v1320 = vsel %vm221, %v1315, 0
    %1322 = vmatprep.subr.bf16.mxu0 0
    %1323 = vmatpush1.bf16.xpose.msra.mxu0 0
    %1324 = vmatprep.subr.bf16.mxu0 0
    %1325 = vmatpush1.bf16.xpose.msra.mxu0 0
    %1326 = vmatprep.subr.bf16.mxu0 0
    %1327 = vmatpush1.bf16.xpose.msra.mxu0 0
    %1328 = vmatprep.subr.bf16.mxu0 0
    %1329 = vmatpush1.bf16.xpose.msra.mxu0 0
    %1330 = vmatprep.subr.bf16.mxu0 0
    %1331 = vmatpush1.bf16.xpose.msra.mxu0 0
    %1332 = vmatprep.subr.bf16.mxu0 0
    %1333 = vmatpush1.bf16.xpose.msra.mxu0 0
    %1334 = vmatprep.subr.bf16.mxu0 0
    %1335 = vmatpush1.bf16.xpose.msra.mxu0 0
    %1336 = vmatprep.subr.bf16.mxu0 0
    %1337 = vmatpush1.bf16.xpose.msra.mxu0 %v1320
    %1338 = vmatprep.subr.bf16.mxu0 0
    %1339 = vmatpush2.bf16.xpose.msra.mxu0 0
    %1340 = vmatprep.subr.bf16.mxu0 0
    %1341 = vmatpush2.bf16.xpose.msra.mxu0 0
    %1342 = vmatprep.subr.bf16.mxu0 0
    %1343 = vmatpush2.bf16.xpose.msra.mxu0 0
    %1344 = vmatprep.subr.bf16.mxu0 0
    %1345 = vmatpush2.bf16.xpose.msra.mxu0 0
    %1346 = vmatprep.subr.bf16.mxu0 0
    %1347 = vmatpush2.bf16.xpose.msra.mxu0 0
    %1348 = vmatprep.subr.bf16.mxu0 0
    %1349 = vmatpush2.bf16.xpose.msra.mxu0 0
    %1350 = vmatprep.subr.bf16.mxu0 0
    %1351 = vmatpush2.bf16.xpose.msra.mxu0 0
    %1352 = vmatprep.subr.bf16.mxu0 0
    %1353 = vmatpush2.bf16.xpose.msra.mxu0 0
    %1354 = vmatprep.mubr.bf16.mxu0 0
    %1355 = vmatmul.mubr.bf16.gmra.mxu0 %v1317
    %v1356 = vpop.f32.mrf.mxu0
    %v1357 = vadd.f32 0.0, %v1356
    %v1358 = vpop.f32.mrf.mxu0
    %v1359 = vpop.f32.mrf.mxu0
    %v1360 = vpop.f32.mrf.mxu0
    %1361 = vdwg.mxu0
    %1362 = vrot.lane.b32.xlu0 %v1089, 112
    %v1363 = vpop.permute.xlu0 %1362
    %1364 = vrot.lane.b32.xlu0 %v1089, 80
    %v1365 = vpop.permute.xlu0 %1364
    %v1367 = vsel %vm221, %v1363, 0
    %v1370 = vsel %vm221, %v1365, 0
    %1372 = vmatprep.subr.bf16.mxu0 0
    %1373 = vmatpush1.bf16.xpose.msra.mxu0 0
    %1374 = vmatprep.subr.bf16.mxu0 0
    %1375 = vmatpush1.bf16.xpose.msra.mxu0 0
    %1376 = vmatprep.subr.bf16.mxu0 0
    %1377 = vmatpush1.bf16.xpose.msra.mxu0 0
    %1378 = vmatprep.subr.bf16.mxu0 0
    %1379 = vmatpush1.bf16.xpose.msra.mxu0 0
    %1380 = vmatprep.subr.bf16.mxu0 0
    %1381 = vmatpush1.bf16.xpose.msra.mxu0 0
    %1382 = vmatprep.subr.bf16.mxu0 0
    %1383 = vmatpush1.bf16.xpose.msra.mxu0 0
    %1384 = vmatprep.subr.bf16.mxu0 0
    %1385 = vmatpush1.bf16.xpose.msra.mxu0 0
    %1386 = vmatprep.subr.bf16.mxu0 0
    %1387 = vmatpush1.bf16.xpose.msra.mxu0 %v1370
    %1388 = vmatprep.subr.bf16.mxu0 0
    %1389 = vmatpush2.bf16.xpose.msra.mxu0 0
    %1390 = vmatprep.subr.bf16.mxu0 0
    %1391 = vmatpush2.bf16.xpose.msra.mxu0 0
    %1392 = vmatprep.subr.bf16.mxu0 0
    %1393 = vmatpush2.bf16.xpose.msra.mxu0 0
    %1394 = vmatprep.subr.bf16.mxu0 0
    %1395 = vmatpush2.bf16.xpose.msra.mxu0 0
    %1396 = vmatprep.subr.bf16.mxu0 0
    %1397 = vmatpush2.bf16.xpose.msra.mxu0 0
    %1398 = vmatprep.subr.bf16.mxu0 0
    %1399 = vmatpush2.bf16.xpose.msra.mxu0 0
    %1400 = vmatprep.subr.bf16.mxu0 0
    %1401 = vmatpush2.bf16.xpose.msra.mxu0 0
    %1402 = vmatprep.subr.bf16.mxu0 0
    %1403 = vmatpush2.bf16.xpose.msra.mxu0 0
    %1404 = vmatprep.mubr.bf16.mxu0 0
    %1405 = vmatmul.mubr.bf16.gmra.mxu0 %v1367
    %v1406 = vpop.f32.mrf.mxu0
    %v1407 = vadd.f32 0.0, %v1406
    %v1408 = vpop.f32.mrf.mxu0
    %v1409 = vpop.f32.mrf.mxu0
    %v1410 = vpop.f32.mrf.mxu0
    %1411 = vdwg.mxu0
    %v1412 = vmul.f32 %v1357, 0.25
    %v1413 = vmul.f32 %v1407, 0.25
    %v1414 = vadd.f32 %v1412, %v322
    %v1415 = vadd.f32 %v1413, %v326
    %v1416 = vsel %vm331, %v1414, -inf
    %1417 = vmax.xlane.f32.xlu0 %v1416
    %v1418 = vpop.xlane.xlu0 %1417
    %v1419 = vsel %vm331, %v1415, -inf
    %1420 = vmax.xlane.f32.xlu0 %v1419
    %v1421 = vpop.xlane.xlu0 %1420
    %v1422 = vsub.f32 %v1414, %v1418
    %v1423 = vsub.f32 %v1415, %v1421
    %v1424 = vmul.f32 %v1422, 1.442695
    %v1425 = vpow.pop %v1424
    %v1426 = vmul.f32 %v1423, 1.442695
    %v1427 = vpow.pop %v1426
    %v1428 = vsel %vm331, %v1425, 0.0
    %1429 = vadd.xlane.f32.xlu0 %v1428
    %v1430 = vpop.xlane.xlu0 %1429
    %v1431 = vsel %vm331, %v1427, 0.0
    %1432 = vadd.xlane.f32.xlu0 %v1431
    %v1433 = vpop.xlane.xlu0 %1432
    %v1434 = vrcp.pop %v1430
    %v1435 = vrcp.pop %v1433
    %v1436 = vmul.f32 %v1425, %v1434
    %v1437 = vmul.f32 %v1427, %v1435
    %v1438 = vpack.c.bf16 %v1436, %v1436
    %v1439 = vpack.c.bf16 %v1437, %v1437
    %1440 = vrot.lane.b32.xlu0 %v1088, 48
    %v1441 = vpop.permute.xlu0 %1440
    %v1443 = vsel %vm331, %v1438, 0
    %v1446 = vsel %vm361, %v1441, 0
    %1448 = vmatprep.subr.bf16.mxu0 0
    %1449 = vmatpush1.bf16.msra.mxu0 0
    %1450 = vmatprep.subr.bf16.mxu0 0
    %1451 = vmatpush1.bf16.msra.mxu0 0
    %1452 = vmatprep.subr.bf16.mxu0 0
    %1453 = vmatpush1.bf16.msra.mxu0 0
    %1454 = vmatprep.subr.bf16.mxu0 0
    %1455 = vmatpush1.bf16.msra.mxu0 0
    %1456 = vmatprep.subr.bf16.mxu0 0
    %1457 = vmatpush1.bf16.msra.mxu0 0
    %1458 = vmatprep.subr.bf16.mxu0 0
    %1459 = vmatpush1.bf16.msra.mxu0 0
    %1460 = vmatprep.subr.bf16.mxu0 0
    %1461 = vmatpush1.bf16.msra.mxu0 0
    %1462 = vmatprep.subr.bf16.mxu0 0
    %1463 = vmatpush1.bf16.msra.mxu0 %v1446
    %1464 = vmatprep.subr.bf16.mxu0 0
    %1465 = vmatpush2.bf16.msra.mxu0 0
    %1466 = vmatprep.subr.bf16.mxu0 0
    %1467 = vmatpush2.bf16.msra.mxu0 0
    %1468 = vmatprep.subr.bf16.mxu0 0
    %1469 = vmatpush2.bf16.msra.mxu0 0
    %1470 = vmatprep.subr.bf16.mxu0 0
    %1471 = vmatpush2.bf16.msra.mxu0 0
    %1472 = vmatprep.subr.bf16.mxu0 0
    %1473 = vmatpush2.bf16.msra.mxu0 0
    %1474 = vmatprep.subr.bf16.mxu0 0
    %1475 = vmatpush2.bf16.msra.mxu0 0
    %1476 = vmatprep.subr.bf16.mxu0 0
    %1477 = vmatpush2.bf16.msra.mxu0 0
    %1478 = vmatprep.subr.bf16.mxu0 0
    %1479 = vmatpush2.bf16.msra.mxu0 0
    %1480 = vmatprep.mubr.bf16.mxu0 0
    %1481 = vmatmul.mubr.bf16.gmra.mxu0 %v1443
    %v1482 = vpop.f32.mrf.mxu0
    %v1483 = vadd.f32 0.0, %v1482
    %v1484 = vpop.f32.mrf.mxu0
    %v1485 = vpop.f32.mrf.mxu0
    %v1486 = vpop.f32.mrf.mxu0
    %1487 = vdwg.mxu0
    %1488 = vrot.lane.b32.xlu0 %v1089, 48
    %v1489 = vpop.permute.xlu0 %1488
    %v1491 = vsel %vm331, %v1439, 0
    %v1494 = vsel %vm361, %v1489, 0
    %1496 = vmatprep.subr.bf16.mxu0 0
    %1497 = vmatpush1.bf16.msra.mxu0 0
    %1498 = vmatprep.subr.bf16.mxu0 0
    %1499 = vmatpush1.bf16.msra.mxu0 0
    %1500 = vmatprep.subr.bf16.mxu0 0
    %1501 = vmatpush1.bf16.msra.mxu0 0
    %1502 = vmatprep.subr.bf16.mxu0 0
    %1503 = vmatpush1.bf16.msra.mxu0 0
    %1504 = vmatprep.subr.bf16.mxu0 0
    %1505 = vmatpush1.bf16.msra.mxu0 0
    %1506 = vmatprep.subr.bf16.mxu0 0
    %1507 = vmatpush1.bf16.msra.mxu0 0
    %1508 = vmatprep.subr.bf16.mxu0 0
    %1509 = vmatpush1.bf16.msra.mxu0 0
    %1510 = vmatprep.subr.bf16.mxu0 0
    %1511 = vmatpush1.bf16.msra.mxu0 %v1494
    %1512 = vmatprep.subr.bf16.mxu0 0
    %1513 = vmatpush2.bf16.msra.mxu0 0
    %1514 = vmatprep.subr.bf16.mxu0 0
    %1515 = vmatpush2.bf16.msra.mxu0 0
    %1516 = vmatprep.subr.bf16.mxu0 0
    %1517 = vmatpush2.bf16.msra.mxu0 0
    %1518 = vmatprep.subr.bf16.mxu0 0
    %1519 = vmatpush2.bf16.msra.mxu0 0
    %1520 = vmatprep.subr.bf16.mxu0 0
    %1521 = vmatpush2.bf16.msra.mxu0 0
    %1522 = vmatprep.subr.bf16.mxu0 0
    %1523 = vmatpush2.bf16.msra.mxu0 0
    %1524 = vmatprep.subr.bf16.mxu0 0
    %1525 = vmatpush2.bf16.msra.mxu0 0
    %1526 = vmatprep.subr.bf16.mxu0 0
    %1527 = vmatpush2.bf16.msra.mxu0 0
    %1528 = vmatprep.mubr.bf16.mxu0 0
    %1529 = vmatmul.mubr.bf16.gmra.mxu0 %v1491
    %v1530 = vpop.f32.mrf.mxu0
    %v1531 = vadd.f32 0.0, %v1530
    %v1532 = vpop.f32.mrf.mxu0
    %v1533 = vpop.f32.mrf.mxu0
    %v1534 = vpop.f32.mrf.mxu0
    %1535 = vdwg.mxu0
    %1538 = vrot.lane.b32.xlu0 %v1483, 16
    %v1539 = vpop.permute.xlu0 %1538
    %1540 = vrot.lane.b32.xlu0 %v1531, 16
    %v1541 = vpop.permute.xlu0 %1540
    %v1544 = vsel %vm221, %v1259, %v1539
    %v1545 = vsel %vm221, %v1307, %v1541
    %s1546 = scalar_lea.vmem %s7, 16
    %v1547 = vld [vmem:[%s1546] sm:$0xf]
    %v1548 = vld [vmem:[%s1546 + $0x4] sm:$0xf]
    %v1549 = vld [vmem:[%s1546 + $0x8] sm:$0xf]
    %v1550 = vld [vmem:[%s1546 + $0xc] sm:$0xf]
    %v1551 = vpack.c.bf16 %v1545, %v1544
    %s1552 = scalar_lea.vmem %s8, 1
    %v1553 = vld [vmem:[%s1552] sm:$0x1]
    %v1555 = vlaneseq
    %v1556 = vshrl.u32 %v1555, 7
    %v1557 = vsub.s32 0, %v1556
    %v1558 = vrot.slane %v1553, %v1557
    %v1564 = vunpack.c.l.b16 %v1547
    %v1565 = vunpack.c.l.b16 %v1548
    %v1566 = vunpack.c.l.b16 %v1549
    %v1567 = vunpack.c.l.b16 %v1550
    %v1568 = vpack.c.b16 %v1565, %v1564
    %v1569 = vpack.c.b16 %v1567, %v1566
    %v1573 = vsel %vm78, %v1551, 0
    %1575 = vmatprep.subr.bf16.mxu0 0
    %1576 = vmatpush1.bf16.msra.mxu0 0
    %1577 = vmatprep.subr.bf16.mxu0 0
    %1578 = vmatpush1.bf16.msra.mxu0 0
    %1579 = vmatprep.subr.bf16.mxu0 0
    %1580 = vmatpush1.bf16.msra.mxu0 0
    %1581 = vmatprep.subr.bf16.mxu0 0
    %1582 = vmatpush1.bf16.msra.mxu0 0
    %1583 = vmatprep.subr.bf16.mxu0 0
    %1584 = vmatpush1.bf16.msra.mxu0 0
    %1585 = vmatprep.subr.bf16.mxu0 0
    %1586 = vmatpush1.bf16.msra.mxu0 0
    %1587 = vmatprep.subr.bf16.mxu0 0
    %1588 = vmatpush1.bf16.msra.mxu0 %v1569
    %1589 = vmatprep.subr.bf16.mxu0 0
    %1590 = vmatpush1.bf16.msra.mxu0 %v1568
    %1591 = vmatprep.subr.bf16.mxu0 0
    %1592 = vmatpush2.bf16.msra.mxu0 0
    %1593 = vmatprep.subr.bf16.mxu0 0
    %1594 = vmatpush2.bf16.msra.mxu0 0
    %1595 = vmatprep.subr.bf16.mxu0 0
    %1596 = vmatpush2.bf16.msra.mxu0 0
    %1597 = vmatprep.subr.bf16.mxu0 0
    %1598 = vmatpush2.bf16.msra.mxu0 0
    %1599 = vmatprep.subr.bf16.mxu0 0
    %1600 = vmatpush2.bf16.msra.mxu0 0
    %1601 = vmatprep.subr.bf16.mxu0 0
    %1602 = vmatpush2.bf16.msra.mxu0 0
    %1603 = vmatprep.subr.bf16.mxu0 0
    %1604 = vmatpush2.bf16.msra.mxu0 0
    %1605 = vmatprep.subr.bf16.mxu0 0
    %1606 = vmatpush2.bf16.msra.mxu0 0
    %1607 = vmatprep.mubr.bf16.mxu0 0
    %1608 = vmatmul.mubr.bf16.gmra.mxu0 %v1573
    %v1609 = vpop.f32.mrf.mxu0
    %v1610 = vadd.f32 %v1558, %v1609
    %v1611 = vpop.f32.mrf.mxu0
    %v1612 = vpop.f32.mrf.mxu0
    %v1613 = vadd.f32 %v1558, %v1612
    %v1614 = vpop.f32.mrf.mxu0
    %1615 = vdwg.mxu0
    %v1616 = vadd.f32 %v1610, %v1016
    %v1617 = vadd.f32 %v1613, %v1017
    %s1618 = scalar_lea.vmem %s9, 1
    %v1619 = vld [vmem:[%s1618] sm:$0x1]
    %s1620 = scalar_lea.vmem %s10, 1
    %v1621 = vld [vmem:[%s1620] sm:$0x1]
    %v1622 = vsel %vm78, %v1616, 0.0
    %1623 = vadd.xlane.f32.xlu0 %v1622
    %v1624 = vpop.xlane.xlu0 %1623
    %v1625 = vsel %vm78, %v1617, 0.0
    %1626 = vadd.xlane.f32.xlu0 %v1625
    %v1627 = vpop.xlane.xlu0 %1626
    %v1628 = vmul.f32 %v1624, %v85
    %v1629 = vmul.f32 %v1627, %v85
    %v1630 = vsub.f32 %v1616, %v1628
    %v1631 = vsub.f32 %v1617, %v1629
    %v1632 = vmul.f32 %v1630, %v1630
    %v1633 = vmul.f32 %v1631, %v1631
    %v1634 = vsel %vm78, %v1632, 0.0
    %1635 = vadd.xlane.f32.xlu0 %v1634
    %v1636 = vpop.xlane.xlu0 %1635
    %v1637 = vsel %vm78, %v1633, 0.0
    %1638 = vadd.xlane.f32.xlu0 %v1637
    %v1639 = vpop.xlane.xlu0 %1638
    %v1640 = vmul.f32 %v1636, %v85
    %v1641 = vmul.f32 %v1639, %v85
    %v1642 = vadd.f32 %v1640, 1e-12
    %v1643 = vadd.f32 %v1641, 1e-12
    %v1644 = vrsqrt.pop %v1642
    %v1645 = vrsqrt.pop %v1643
    %v1646 = vmul.f32 %v1630, %v1644
    %v1647 = vmul.f32 %v1631, %v1645
    %v1649 = vlaneseq
    %v1650 = vshrl.u32 %v1649, 7
    %v1651 = vsub.s32 0, %v1650
    %v1652 = vrot.slane %v1619, %v1651
    %v1654 = vmul.f32 %v1646, %v1652
    %v1655 = vmul.f32 %v1647, %v1652
    %v1657 = vlaneseq
    %v1658 = vshrl.u32 %v1657, 7
    %v1659 = vsub.s32 0, %v1658
    %v1660 = vrot.slane %v1621, %v1659
    %v1662 = vadd.f32 %v1654, %v1660
    %v1663 = vadd.f32 %v1655, %v1660
    %s1664 = scalar_lea.vmem %s11, 16
    %v1665 = vld [vmem:[%s1664] sm:$0xf]
    %v1666 = vld [vmem:[%s1664 + $0x4] sm:$0xf]
    %v1667 = vld [vmem:[%s1664 + $0x8] sm:$0xf]
    %v1668 = vld [vmem:[%s1664 + $0xc] sm:$0xf]
    %v1669 = vpack.c.bf16 %v1663, %v1662
    %s1670 = scalar_lea.vmem %s12, 1
    %v1671 = vld [vmem:[%s1670] sm:$0x1]
    %v1673 = vlaneseq
    %v1674 = vshrl.u32 %v1673, 7
    %v1675 = vsub.s32 0, %v1674
    %v1676 = vrot.slane %v1671, %v1675
    %v1682 = vunpack.c.l.b16 %v1665
    %v1683 = vunpack.c.l.b16 %v1666
    %v1684 = vunpack.c.l.b16 %v1667
    %v1685 = vunpack.c.l.b16 %v1668
    %v1686 = vpack.c.b16 %v1683, %v1682
    %v1687 = vpack.c.b16 %v1685, %v1684
    %v1691 = vsel %vm78, %v1669, 0
    %1693 = vmatprep.subr.bf16.mxu0 0
    %1694 = vmatpush1.bf16.msra.mxu0 0
    %1695 = vmatprep.subr.bf16.mxu0 0
    %1696 = vmatpush1.bf16.msra.mxu0 0
    %1697 = vmatprep.subr.bf16.mxu0 0
    %1698 = vmatpush1.bf16.msra.mxu0 0
    %1699 = vmatprep.subr.bf16.mxu0 0
    %1700 = vmatpush1.bf16.msra.mxu0 0
    %1701 = vmatprep.subr.bf16.mxu0 0
    %1702 = vmatpush1.bf16.msra.mxu0 0
    %1703 = vmatprep.subr.bf16.mxu0 0
    %1704 = vmatpush1.bf16.msra.mxu0 0
    %1705 = vmatprep.subr.bf16.mxu0 0
    %1706 = vmatpush1.bf16.msra.mxu0 %v1687
    %1707 = vmatprep.subr.bf16.mxu0 0
    %1708 = vmatpush1.bf16.msra.mxu0 %v1686
    %1709 = vmatprep.subr.bf16.mxu0 0
    %1710 = vmatpush2.bf16.msra.mxu0 0
    %1711 = vmatprep.subr.bf16.mxu0 0
    %1712 = vmatpush2.bf16.msra.mxu0 0
    %1713 = vmatprep.subr.bf16.mxu0 0
    %1714 = vmatpush2.bf16.msra.mxu0 0
    %1715 = vmatprep.subr.bf16.mxu0 0
    %1716 = vmatpush2.bf16.msra.mxu0 0
    %1717 = vmatprep.subr.bf16.mxu0 0
    %1718 = vmatpush2.bf16.msra.mxu0 0
    %1719 = vmatprep.subr.bf16.mxu0 0
    %1720 = vmatpush2.bf16.msra.mxu0 0
    %1721 = vmatprep.subr.bf16.mxu0 0
    %1722 = vmatpush2.bf16.msra.mxu0 0
    %1723 = vmatprep.subr.bf16.mxu0 0
    %1724 = vmatpush2.bf16.msra.mxu0 0
    %1725 = vmatprep.mubr.bf16.mxu0 0
    %1726 = vmatmul.mubr.bf16.gmra.mxu0 %v1691
    %v1727 = vpop.f32.mrf.mxu0
    %v1728 = vadd.f32 %v1676, %v1727
    %v1729 = vpop.f32.mrf.mxu0
    %v1730 = vpop.f32.mrf.mxu0
    %v1731 = vadd.f32 %v1676, %v1730
    %v1732 = vpop.f32.mrf.mxu0
    %1733 = vdwg.mxu0
    %v1734 = vmul.f32 %v1728, 0.5
    %v1735 = vmul.f32 %v1731, 0.5
    %v1736 = vmul.f32 %v1728, 0.044715
    %v1737 = vmul.f32 %v1731, 0.044715
    %v1738 = vmul.f32 %v1736, %v1728
    %v1739 = vmul.f32 %v1737, %v1731
    %v1740 = vmul.f32 %v1738, %v1728
    %v1741 = vmul.f32 %v1739, %v1731
    %v1742 = vadd.f32 %v1728, %v1740
    %v1743 = vadd.f32 %v1731, %v1741
    %v1744 = vmul.f32 %v1742, 0.7978846
    %v1745 = vmul.f32 %v1743, 0.7978846
    %v1746 = vtanh.pop %v1744
    %v1747 = vtanh.pop %v1745
    %v1748 = vadd.f32 %v1746, 1.0
    %v1749 = vadd.f32 %v1747, 1.0
    %v1750 = vmul.f32 %v1734, %v1748
    %v1751 = vmul.f32 %v1735, %v1749
    %s1752 = scalar_lea.vmem %s13, 32
    %v1753 = vld [vmem:[%s1752] sm:$0xf]
    %v1754 = vld [vmem:[%s1752 + $0x4] sm:$0xf]
    %v1755 = vld [vmem:[%s1752 + $0x8] sm:$0xf]
    %v1756 = vld [vmem:[%s1752 + $0xc] sm:$0xf]
    %v1757 = vld [vmem:[%s1752 + $0x10] sm:$0xf]
    %v1758 = vld [vmem:[%s1752 + $0x14] sm:$0xf]
    %v1759 = vld [vmem:[%s1752 + $0x18] sm:$0xf]
    %v1760 = vld [vmem:[%s1752 + $0x1c] sm:$0xf]
    %v1761 = vpack.c.bf16 %v1751, %v1750
    %s1762 = scalar_lea.vmem %s14, 1
    %v1763 = vld [vmem:[%s1762] sm:$0x1]
    %v1765 = vlaneseq
    %v1766 = vshrl.u32 %v1765, 7
    %v1767 = vsub.s32 0, %v1766
    %v1768 = vrot.slane %v1763, %v1767
    %v1778 = vunpack.c.l.b16 %v1753
    %v1779 = vunpack.c.l.b16 %v1754
    %v1780 = vunpack.c.l.b16 %v1755
    %v1781 = vunpack.c.l.b16 %v1756
    %v1782 = vunpack.c.l.b16 %v1757
    %v1783 = vunpack.c.l.b16 %v1758
    %v1784 = vunpack.c.l.b16 %v1759
    %v1785 = vunpack.c.l.b16 %v1760
    %v1786 = vpack.c.b16 %v1779, %v1778
    %v1787 = vpack.c.b16 %v1781, %v1780
    %v1788 = vpack.c.b16 %v1783, %v1782
    %v1789 = vpack.c.b16 %v1785, %v1784
    %v1795 = vsel %vm927, %v1761, 0
    %1797 = vmatprep.subr.bf16.mxu0 0
    %1798 = vmatpush1.bf16.msra.mxu0 0
    %1799 = vmatprep.subr.bf16.mxu0 0
    %1800 = vmatpush1.bf16.msra.mxu0 0
    %1801 = vmatprep.subr.bf16.mxu0 0
    %1802 = vmatpush1.bf16.msra.mxu0 0
    %1803 = vmatprep.subr.bf16.mxu0 0
    %1804 = vmatpush1.bf16.msra.mxu0 0
    %1805 = vmatprep.subr.bf16.mxu0 0
    %1806 = vmatpush1.bf16.msra.mxu0 %v1789
    %1807 = vmatprep.subr.bf16.mxu0 0
    %1808 = vmatpush1.bf16.msra.mxu0 %v1788
    %1809 = vmatprep.subr.bf16.mxu0 0
    %1810 = vmatpush1.bf16.msra.mxu0 %v1787
    %1811 = vmatprep.subr.bf16.mxu0 0
    %1812 = vmatpush1.bf16.msra.mxu0 %v1786
    %1813 = vmatprep.subr.bf16.mxu0 0
    %1814 = vmatpush2.bf16.msra.mxu0 0
    %1815 = vmatprep.subr.bf16.mxu0 0
    %1816 = vmatpush2.bf16.msra.mxu0 0
    %1817 = vmatprep.subr.bf16.mxu0 0
    %1818 = vmatpush2.bf16.msra.mxu0 0
    %1819 = vmatprep.subr.bf16.mxu0 0
    %1820 = vmatpush2.bf16.msra.mxu0 0
    %1821 = vmatprep.subr.bf16.mxu0 0
    %1822 = vmatpush2.bf16.msra.mxu0 0
    %1823 = vmatprep.subr.bf16.mxu0 0
    %1824 = vmatpush2.bf16.msra.mxu0 0
    %1825 = vmatprep.subr.bf16.mxu0 0
    %1826 = vmatpush2.bf16.msra.mxu0 0
    %1827 = vmatprep.subr.bf16.mxu0 0
    %1828 = vmatpush2.bf16.msra.mxu0 0
    %1829 = vmatprep.mubr.bf16.mxu0 0
    %1830 = vmatmul.mubr.bf16.gmra.mxu0 %v1795
    %v1831 = vpop.f32.mrf.mxu0
    %v1832 = vadd.f32 %v1768, %v1831
    %v1833 = vpop.f32.mrf.mxu0
    %v1834 = vpop.f32.mrf.mxu0
    %v1835 = vadd.f32 %v1768, %v1834
    %v1836 = vpop.f32.mrf.mxu0
    %1837 = vdwg.mxu0
    %v1838 = vadd.f32 %v1832, %v1662
    %v1839 = vadd.f32 %v1835, %v1663
    %s1840 = scalar_lea.vmem %s15, 1
    %v1841 = vld [vmem:[%s1840] sm:$0x1]
    %s1842 = scalar_lea.vmem %s16, 1
    %v1843 = vld [vmem:[%s1842] sm:$0x1]
    %v1844 = vsel %vm78, %v1838, 0.0
    %1845 = vadd.xlane.f32.xlu0 %v1844
    %v1846 = vpop.xlane.xlu0 %1845
    %v1847 = vsel %vm78, %v1839, 0.0
    %1848 = vadd.xlane.f32.xlu0 %v1847
    %v1849 = vpop.xlane.xlu0 %1848
    %v1850 = vmul.f32 %v1846, %v85
    %v1851 = vmul.f32 %v1849, %v85
    %v1852 = vsub.f32 %v1838, %v1850
    %v1853 = vsub.f32 %v1839, %v1851
    %v1854 = vmul.f32 %v1852, %v1852
    %v1855 = vmul.f32 %v1853, %v1853
    %v1856 = vsel %vm78, %v1854, 0.0
    %1857 = vadd.xlane.f32.xlu0 %v1856
    %v1858 = vpop.xlane.xlu0 %1857
    %v1859 = vsel %vm78, %v1855, 0.0
    %1860 = vadd.xlane.f32.xlu0 %v1859
    %v1861 = vpop.xlane.xlu0 %1860
    %v1862 = vmul.f32 %v1858, %v85
    %v1863 = vmul.f32 %v1861, %v85
    %v1864 = vadd.f32 %v1862, 1e-12
    %v1865 = vadd.f32 %v1863, 1e-12
    %v1866 = vrsqrt.pop %v1864
    %v1867 = vrsqrt.pop %v1865
    %v1868 = vmul.f32 %v1852, %v1866
    %v1869 = vmul.f32 %v1853, %v1867
    %v1871 = vlaneseq
    %v1872 = vshrl.u32 %v1871, 7
    %v1873 = vsub.s32 0, %v1872
    %v1874 = vrot.slane %v1841, %v1873
    %v1876 = vmul.f32 %v1868, %v1874
    %v1877 = vmul.f32 %v1869, %v1874
    %v1879 = vlaneseq
    %v1880 = vshrl.u32 %v1879, 7
    %v1881 = vsub.s32 0, %v1880
    %v1882 = vrot.slane %v1843, %v1881
    %v1884 = vadd.f32 %v1876, %v1882
    %v1885 = vadd.f32 %v1877, %v1882
    %v1887 = vrot.slane %v1885, 7
    %vm1889 = vcmask 1040384
    %v1890 = vsel %vm1889, %v1884, %v1887
    %v1891 = vld [vmem:[%s17] sm:$0xf]
    %v1892 = vld [vmem:[%s17 + $0x4] sm:$0xf]
    %v1893 = vld [vmem:[%s17 + $0x8] sm:$0xf]
    %v1894 = vld [vmem:[%s17 + $0xc] sm:$0xf]
    %v1895 = vpack.c.bf16 %v1890, %v1890
    %v1896 = vld [vmem:[%s18] sm:$0x1]
    %v1898 = vlaneseq
    %v1899 = vshrl.u32 %v1898, 7
    %v1900 = vsub.s32 0, %v1899
    %v1901 = vrot.slane %v1896, %v1900
    %v1907 = vunpack.c.l.b16 %v1891
    %v1908 = vunpack.c.l.b16 %v1892
    %v1909 = vunpack.c.l.b16 %v1893
    %v1910 = vunpack.c.l.b16 %v1894
    %v1911 = vpack.c.b16 %v1908, %v1907
    %v1912 = vpack.c.b16 %v1910, %v1909
    %v1916 = vsel %vm78, %v1895, 0
    %1918 = vmatprep.subr.bf16.mxu0 0
    %1919 = vmatpush1.bf16.msra.mxu0 0
    %1920 = vmatprep.subr.bf16.mxu0 0
    %1921 = vmatpush1.bf16.msra.mxu0 0
    %1922 = vmatprep.subr.bf16.mxu0 0
    %1923 = vmatpush1.bf16.msra.mxu0 0
    %1924 = vmatprep.subr.bf16.mxu0 0
    %1925 = vmatpush1.bf16.msra.mxu0 0
    %1926 = vmatprep.subr.bf16.mxu0 0
    %1927 = vmatpush1.bf16.msra.mxu0 0
    %1928 = vmatprep.subr.bf16.mxu0 0
    %1929 = vmatpush1.bf16.msra.mxu0 0
    %1930 = vmatprep.subr.bf16.mxu0 0
    %1931 = vmatpush1.bf16.msra.mxu0 %v1912
    %1932 = vmatprep.subr.bf16.mxu0 0
    %1933 = vmatpush1.bf16.msra.mxu0 %v1911
    %1934 = vmatprep.subr.bf16.mxu0 0
    %1935 = vmatpush2.bf16.msra.mxu0 0
    %1936 = vmatprep.subr.bf16.mxu0 0
    %1937 = vmatpush2.bf16.msra.mxu0 0
    %1938 = vmatprep.subr.bf16.mxu0 0
    %1939 = vmatpush2.bf16.msra.mxu0 0
    %1940 = vmatprep.subr.bf16.mxu0 0
    %1941 = vmatpush2.bf16.msra.mxu0 0
    %1942 = vmatprep.subr.bf16.mxu0 0
    %1943 = vmatpush2.bf16.msra.mxu0 0
    %1944 = vmatprep.subr.bf16.mxu0 0
    %1945 = vmatpush2.bf16.msra.mxu0 0
    %1946 = vmatprep.subr.bf16.mxu0 0
    %1947 = vmatpush2.bf16.msra.mxu0 0
    %1948 = vmatprep.subr.bf16.mxu0 0
    %1949 = vmatpush2.bf16.msra.mxu0 0
    %1950 = vmatprep.mubr.bf16.mxu0 0
    %1951 = vmatmul.mubr.bf16.gmra.mxu0 %v1916
    %v1952 = vpop.f32.mrf.mxu0
    %v1953 = vadd.f32 %v1901, %v1952
    %v1954 = vpop.f32.mrf.mxu0
    %v1955 = vpop.f32.mrf.mxu0
    %v1956 = vpop.f32.mrf.mxu0
    %1957 = vdwg.mxu0
    %v1958 = vtanh.pop %v1953
    %v1959 = vld [vmem:[%s19] sm:$0xf]
    %v1960 = vld [vmem:[%s19 + $0x4] sm:$0xf]
    %v1961 = vld [vmem:[%s19 + $0x8] sm:$0xf]
    %v1962 = vld [vmem:[%s19 + $0xc] sm:$0xf]
    %v1963 = vpack.c.bf16 %v1958, %v1958
    %v1964 = vld [vmem:[%s20] sm:$0x1]
    %v1966 = vlaneseq
    %v1967 = vshrl.u32 %v1966, 7
    %v1968 = vsub.s32 0, %v1967
    %v1969 = vrot.slane %v1964, %v1968
    %v1975 = vunpack.c.l.b16 %v1959
    %v1976 = vunpack.c.l.b16 %v1960
    %v1977 = vunpack.c.l.b16 %v1961
    %v1978 = vunpack.c.l.b16 %v1962
    %v1979 = vpack.c.b16 %v1976, %v1975
    %v1980 = vpack.c.b16 %v1978, %v1977
    %v1984 = vsel %vm78, %v1963, 0
    %1986 = vmatprep.subr.bf16.mxu0 0
    %1987 = vmatpush1.bf16.msra.mxu0 0
    %1988 = vmatprep.subr.bf16.mxu0 0
    %1989 = vmatpush1.bf16.msra.mxu0 0
    %1990 = vmatprep.subr.bf16.mxu0 0
    %1991 = vmatpush1.bf16.msra.mxu0 0
    %1992 = vmatprep.subr.bf16.mxu0 0
    %1993 = vmatpush1.bf16.msra.mxu0 0
    %1994 = vmatprep.subr.bf16.mxu0 0
    %1995 = vmatpush1.bf16.msra.mxu0 0
    %1996 = vmatprep.subr.bf16.mxu0 0
    %1997 = vmatpush1.bf16.msra.mxu0 0
    %1998 = vmatprep.subr.bf16.mxu0 0
    %1999 = vmatpush1.bf16.msra.mxu0 %v1980
    %2000 = vmatprep.subr.bf16.mxu0 0
    %2001 = vmatpush1.bf16.msra.mxu0 %v1979
    %2002 = vmatprep.subr.bf16.mxu0 0
    %2003 = vmatpush2.bf16.msra.mxu0 0
    %2004 = vmatprep.subr.bf16.mxu0 0
    %2005 = vmatpush2.bf16.msra.mxu0 0
    %2006 = vmatprep.subr.bf16.mxu0 0
    %2007 = vmatpush2.bf16.msra.mxu0 0
    %2008 = vmatprep.subr.bf16.mxu0 0
    %2009 = vmatpush2.bf16.msra.mxu0 0
    %2010 = vmatprep.subr.bf16.mxu0 0
    %2011 = vmatpush2.bf16.msra.mxu0 0
    %2012 = vmatprep.subr.bf16.mxu0 0
    %2013 = vmatpush2.bf16.msra.mxu0 0
    %2014 = vmatprep.subr.bf16.mxu0 0
    %2015 = vmatpush2.bf16.msra.mxu0 0
    %2016 = vmatprep.subr.bf16.mxu0 0
    %2017 = vmatpush2.bf16.msra.mxu0 0
    %2018 = vmatprep.mubr.bf16.mxu0 0
    %2019 = vmatmul.mubr.bf16.gmra.mxu0 %v1984
    %v2020 = vpop.f32.mrf.mxu0
    %v2021 = vadd.f32 %v1969, %v2020
    %v2022 = vpop.f32.mrf.mxu0
    %v2023 = vpop.f32.mrf.mxu0
    %v2024 = vpop.f32.mrf.mxu0
    %2025 = vdwg.mxu0
    %vm2026 = vcmask 9216
    %2027 = vst.msk [vmem:[#allocation4] sm:$0x3] %vm2026, %v2021
    %v2028 = vsel %vm2026, %v2021, -inf
    %2029 = vmax.xlane.f32.xlu0 %v2028
    %v2030 = vpop.xlane.xlu0 %2029
    %v2031 = vsub.f32 %v2021, %v2030
    %v2032 = vmul.f32 %v2031, 1.442695
    %v2033 = vpow.pop %v2032
    %v2034 = vsel %vm2026, %v2033, 0.0
    %2035 = vadd.xlane.f32.xlu0 %v2034
    %v2036 = vpop.xlane.xlu0 %2035
    %v2037 = vrcp.pop %v2036
    %v2038 = vmul.f32 %v2033, %v2037
    %2039 = vst.msk [vmem:[#allocation6] sm:$0x3] %vm2026, %v2038
    %v2040 = vlog2.pop %v2036
    %v2041 = vmul.f32 %v2040, 0.6931472
    %v2042 = vsub.f32 %v2031, %v2041
    %v2043 = vld [vmem:[%s2] sm:$0x3]
    %v2044 = vmul.f32 %v2043, %v2042
    %v2045 = vsel %vm2026, %v2044, 0.0
    %2046 = vadd.xlane.f32.xlu0 %v2045
    %v2047 = vpop.xlane.xlu0 %2046
    %v2048 = vsub.f32 0.0, %v2047
    %vm2049 = vcmask 1024
    %v2050 = vsel %vm2049, %v2048, 0.0
    %2051 = vadd.xlane.f32.xlu0 %v2050
    %v2052 = vpop.xlane.xlu0 %2051
    %v2053 = vrot.slane %v2052, 4
    %v2054 = vadd.f32 %v2052, %v2053
    %v2055 = vrot.slane %v2054, 2
    %v2056 = vadd.f32 %v2054, %v2055
    %v2057 = vrot.slane %v2056, 1
    %v2058 = vadd.f32 %v2056, %v2057
    %s2059 = vtos %v2058
    %v2060 = vstv %s2059
    %v2061 = vrcp.pop 2.0
    %v2062 = vmul.f32 %v2060, %v2061
    %vm2063 = vcmask 0
    %2064 = vst.msk [vmem:[#allocation2] sm:$0x1] %vm2063, %v2062
    // Predicated region
    $region86: #{bert_forward.1} parent=1 // pred_check
      _
    $region87: #{bert_forward.1} parent=1 // pred_check_branch
      %2066 = sbr.rel (0) target = $region89
    $region88: #{bert_forward.1} parent=1 // pred_region
      %s2068 = ssub.s32 16, 16
      %2069 = vsyncadd [#allocation3], %s2068
      %s2071 = sshll.u32 [#allocation2], 4
      %s2072 = int_to_ptr.vmem [resolvable:$true] %s2071
      %2074 = dma.vmem_to_hbm [thread:$0]  %s2072, 16, %s21, [#allocation3]
    $region89: #{bert_forward.1} parent=1 // pred_fallthru
      _
    // Predicated region
    $region90: #{bert_forward.1} parent=1 // pred_check
      _
    $region91: #{bert_forward.1} parent=1 // pred_check_branch
      %2076 = sbr.rel (0) target = $region93
    $region92: #{bert_forward.1} parent=1 // pred_region
      %s2078 = ssub.s32 32, 32
      %2079 = vsyncadd [#allocation5], %s2078
      %s2081 = sshll.u32 [#allocation4], 4
      %s2082 = int_to_ptr.vmem [resolvable:$true] %s2081
      %2084 = dma.vmem_to_hbm [thread:$0]  %s2082, 32, %s22, [#allocation5]
    $region93: #{bert_forward.1} parent=1 // pred_fallthru
      _
    // Predicated region
    $region94: #{bert_forward.1} parent=1 // pred_check
      _
    $region95: #{bert_forward.1} parent=1 // pred_check_branch
      %2086 = sbr.rel (0) target = $region97
    $region96: #{bert_forward.1} parent=1 // pred_region
      %s2088 = ssub.s32 32, 32
      %2089 = vsyncadd [#allocation5], %s2088
      %s2091 = sshll.u32 [#allocation6], 4
      %s2092 = int_to_ptr.vmem [resolvable:$true] %s2091
      %2094 = dma.vmem_to_hbm [thread:$0]  %s2092, 32, %s23, [#allocation5]
    $region97: #{bert_forward.1} parent=1 // pred_fallthru
      _
    // Predicated region
    $region98: #{bert_forward.1} parent=1 // pred_check
      _
    $region99: #{bert_forward.1} parent=1 // pred_check_branch
      %2096 = sbr.rel (0) target = $region101
    $region100: #{bert_forward.1} parent=1 // pred_region
      %2097 = dma.done [#allocation3], 16
    $region101: #{bert_forward.1} parent=1 // pred_fallthru
      _
    // Predicated region
    $region102: #{bert_forward.1} parent=1 // pred_check
      _
    $region103: #{bert_forward.1} parent=1 // pred_check_branch
      %2099 = sbr.rel (0) target = $region105
    $region104: #{bert_forward.1} parent=1 // pred_region
      %2100 = dma.done [#allocation5], 32
    $region105: #{bert_forward.1} parent=1 // pred_fallthru
      _
    // Predicated region
    $region106: #{bert_forward.1} parent=1 // pred_check
      _
    $region107: #{bert_forward.1} parent=1 // pred_check_branch
      %2102 = sbr.rel (0) target = $region109
    $region108: #{bert_forward.1} parent=1 // pred_region
      %2103 = dma.done [#allocation5], 32
    $region109: #{bert_forward.1} parent=1 // pred_fallthru
      _
    %2104 = vsyncpa [#allocation3], 1
    %2105 = vsyncpa [#allocation5], 1

</llo_original>
